<compile_context>
chip_gen: v7x
topology: tpu7x:2x2x1
jax: 0.10.0
libtpu: 0.0.40
codegen_flags: <defaults>
</compile_context>

<pallas_src>
import jax
import jax.numpy as jnp
from jax import lax
from jax.experimental import pallas as pl
from jax.experimental.pallas import tpu as pltpu

POOL = 101  # AvgPool1d kernel size from the module


def _temporal_pooling_kernel(x_ref, w_ref, b_ref, o_ref):
    # x_ref: (TN, K)  lane-dense flattened prefix of the pool window.
    # w_ref: (K, C)   tile(w1.T @ w2.T, (POOL, 1)) / POOL, zero rows for the
    #                 alignment-padding columns beyond sample 100.
    # b_ref: (1, C)   b1 @ w2.T + b2
    # Single MXU GEMM: pool-mean + fc1 + fc2 all folded into w_ref / b_ref.
    acc = jnp.dot(x_ref[...], w_ref[...], preferred_element_type=jnp.float32)
    o_ref[...] = (acc + b_ref[...]).astype(o_ref.dtype)


def temporal_pooling_spk(x, w1, b1, w2, b2, *, tn=512):
    """x: (N, S, C); w1,w2: (C, C); b1,b2: (C,) -> (N, 1, C)."""
    N, S, C = x.shape
    # The module only yields a (N, 1, C) output for a single 101-sample pool
    # window (AvgPool1d(101) has stride 101); samples beyond 101 are ignored.
    assert POOL <= S < 2 * POOL, (
        "TemporalPooling_spk semantics require 101 <= samples <= 201 "
        f"(got {S})")

    # --- choose the lane-dense flattened window width K -------------------
    k_pool = POOL * C                       # columns actually pooled
    k_full = S * C                          # full flattened row length
    k_128 = ((k_pool + 127) // 128) * 128   # lane-aligned block width
    K = k_128 if k_full >= k_128 else k_full  # either 128-multiple or full dim

    x_flat = x.reshape(N, k_full)           # free (bitcast) under jit

    # --- fuse mean + fc1 + fc2 into one weight/bias (no nonlinearity) -----
    w1t = jnp.asarray(w1, jnp.float32).T
    w2t = jnp.asarray(w2, jnp.float32).T
    w_fused = jnp.dot(w1t, w2t, precision=lax.Precision.HIGHEST)       # (C, C)
    b_fused = (jnp.dot(jnp.asarray(b1, jnp.float32), w2t,
                       precision=lax.Precision.HIGHEST)
               + jnp.asarray(b2, jnp.float32))                          # (C,)
    w_big = jnp.tile(w_fused, (POOL, 1)) * (1.0 / POOL)                 # (k_pool, C)
    if K > k_pool:
        # Zero-weight the (< 128) alignment-padding columns (samples 101..).
        w_big = jnp.concatenate(
            [w_big, jnp.zeros((K - k_pool, C), w_big.dtype)], axis=0)
    if x.dtype != jnp.float32:
        w_big = w_big.astype(x.dtype)       # keep the GEMM single-dtype
    b_row = b_fused.reshape(1, C)

    # --- batch tiling: no padding, partial tail block handled by the grid --
    tn = max(8, (tn // 8) * 8)
    TN = N if N <= tn else tn               # TN == N (full dim) or multiple of 8
    grid = pl.cdiv(N, TN)

    itemsize = x.dtype.itemsize
    vmem_bytes = (2 * TN * K * itemsize      # x double buffer
                  + 2 * K * C * w_big.dtype.itemsize
                  + 2 * TN * C * itemsize    # output buffers
                  + 2 * C * 4
                  + (2 << 20))               # headroom
    vmem_limit = int(min(max(vmem_bytes, 16 << 20), 64 << 20))

    cost = pl.CostEstimate(
        flops=2 * N * K * C,
        transcendentals=0,
        bytes_accessed=N * K * itemsize + N * C * itemsize
        + K * C * w_big.dtype.itemsize + C * 4,
    )

    out2d = pl.pallas_call(
        _temporal_pooling_kernel,
        out_shape=jax.ShapeDtypeStruct((N, C), x.dtype),
        grid_spec=pltpu.PrefetchScalarGridSpec(
            num_scalar_prefetch=0,
            grid=(grid,),
            in_specs=[
                pl.BlockSpec((TN, K), lambda i: (i, 0)),   # x window (lane-dense)
                pl.BlockSpec((K, C), lambda i: (0, 0)),    # fused weight (resident)
                pl.BlockSpec((1, C), lambda i: (0, 0)),    # fused bias  (resident)
            ],
            out_specs=pl.BlockSpec((TN, C), lambda i: (i, 0)),
        ),
        compiler_params=pltpu.CompilerParams(
            dimension_semantics=("parallel",),
            vmem_limit_bytes=vmem_limit,
        ),
        cost_estimate=cost,
    )(x_flat, w_big, b_row)

    # (N, C) -> (N, 1, C)
    return out2d[:, None, :]


def _reference(x, w1, b1, w2, b2):
    tap = jnp.mean(x[:, :POOL, :], axis=1)
    ff1 = tap @ w1.T + b1
    ff2 = ff1 @ w2.T + b2
    return ff2[:, None, :]


if __name__ == "__main__":
    N = 2
    C = 32          # n_channels
    S = 160         # samples: one 101-wide pool window; trailing samples ignored

    key = jax.random.PRNGKey(0)
    kx, kw1, kb1, kw2, kb2 = jax.random.split(key, 5)

    x = jax.random.normal(kx, (N, S, C), dtype=jnp.float32)

    # PyTorch-style Linear init: uniform(-1/sqrt(C), 1/sqrt(C))
    bound = 1.0 / (C ** 0.5)
    w1 = jax.random.uniform(kw1, (C, C), jnp.float32, -bound, bound)
    b1 = jax.random.uniform(kb1, (C,), jnp.float32, -bound, bound)
    w2 = jax.random.uniform(kw2, (C, C), jnp.float32, -bound, bound)
    b2 = jax.random.uniform(kb2, (C,), jnp.float32, -bound, bound)

    fwd = jax.jit(temporal_pooling_spk)
    out = jax.block_until_ready(fwd(x, w1, b1, w2, b2))

    ref = _reference(x, w1, b1, w2, b2)
    assert out.shape == (N, 1, C), out.shape
    # Tolerance covers TPU default f32-matmul precision (bf16 MXU passes) plus
    # the fc1∘fc2 / mean-into-GEMM re-association; real bugs are O(1e-2+).
    assert jnp.allclose(out, ref, atol=5e-3, rtol=5e-3), "mismatch vs reference"

    print("KERNEL_OK")
</pallas_src>

<mosaic_0001>
module attributes {stable_mosaic.version = 11 : i64} {
  func.func @_temporal_pooling_kernel(%arg0: i32, %arg1: memref<2x3328xf32, #tpu.memory_space<vmem>>, %arg2: memref<3328x32xf32, #tpu.memory_space<vmem>>, %arg3: memref<1x32xf32, #tpu.memory_space<vmem>>, %arg4: memref<2x32xf32, #tpu.memory_space<vmem>>) attributes {dimension_semantics = [#tpu.dimension_semantics<parallel>], iteration_bounds = array<i64: 1>, scalar_prefetch = 0 : i64, scratch_operands = 0 : i64, tpu.core_type = #tpu.core_type<tc>, window_params = [{transform_indices = @transform_0, window_bounds = array<i64: 2, 3328>}, {pipeline_mode = #tpu.pipeline_mode<synchronous>, transform_indices = @transform_1, window_bounds = array<i64: 3328, 32>}, {pipeline_mode = #tpu.pipeline_mode<synchronous>, transform_indices = @transform_2, window_bounds = array<i64: 1, 32>}, {transform_indices = @transform_3, window_bounds = array<i64: 2, 32>}]} {
    %c0 = arith.constant 0 : index
    %c0_0 = arith.constant 0 : index
    %0 = vector.load %arg1[%c0, %c0_0] : memref<2x3328xf32, #tpu.memory_space<vmem>>, vector<2x3328xf32>
    %c0_1 = arith.constant 0 : index
    %c0_2 = arith.constant 0 : index
    %1 = vector.load %arg2[%c0_1, %c0_2] : memref<3328x32xf32, #tpu.memory_space<vmem>>, vector<3328x32xf32>
    %cst = arith.constant dense<0.000000e+00> : vector<2x32xf32>
    %2 = tpu.matmul %0, %1, %cst {dimension_numbers = #tpu.dot_dimension_numbers<[1], [0], [0], [1], [0, 0, 1, 1], [], []>} : vector<2x3328xf32>, vector<3328x32xf32>, vector<2x32xf32> -> vector<2x32xf32>
    %c0_3 = arith.constant 0 : index
    %c0_4 = arith.constant 0 : index
    %3 = vector.load %arg3[%c0_3, %c0_4] : memref<1x32xf32, #tpu.memory_space<vmem>>, vector<1x32xf32>
    %4 = vector.broadcast %3 : vector<1x32xf32> to vector<2x32xf32>
    %5 = arith.addf %2, %4 : vector<2x32xf32>
    %c0_5 = arith.constant 0 : index
    %c0_6 = arith.constant 0 : index
    %6 = vector.load %arg4[%c0_5, %c0_6] : memref<2x32xf32, #tpu.memory_space<vmem>>, vector<2x32xf32>
    tpu.vector_store %arg4[%c0_5, %c0_6], %5 {strides = array<i32>} : memref<2x32xf32, #tpu.memory_space<vmem>>, vector<2x32xf32>,
    return
  }
  func.func @transform_0(%arg0: i32) -> (i32, i32) {
    %c0_i32 = arith.constant 0 : i32
    %c0_i32_0 = arith.constant 0 : i32
    return %arg0, %c0_i32 : i32, i32
  }
  func.func @transform_1(%arg0: i32) -> (i32, i32) {
    %c0_i32 = arith.constant 0 : i32
    %c0_i32_0 = arith.constant 0 : i32
    %c0_i32_1 = arith.constant 0 : i32
    return %c0_i32, %c0_i32_0 : i32, i32
  }
  func.func @transform_2(%arg0: i32) -> (i32, i32) {
    %c0_i32 = arith.constant 0 : i32
    %c0_i32_0 = arith.constant 0 : i32
    %c0_i32_1 = arith.constant 0 : i32
    return %c0_i32, %c0_i32_0 : i32, i32
  }
  func.func @transform_3(%arg0: i32) -> (i32, i32) {
    %c0_i32 = arith.constant 0 : i32
    %c0_i32_0 = arith.constant 0 : i32
    return %arg0, %c0_i32 : i32, i32
  }
}

</mosaic_0001>

<llo_original>
// kernel: temporal_pooling_spk.1
$region0: #{temporal_pooling_spk.1}
  #allocation0 [shape = 'u32[]', space=smem, size = 0x4, offset = 0x4, fixed_abs, tag = 'smem constant byte address 0x4 - core index']
  #allocation1 [shape = 'u32[144,128]{1,0:T(1,128)}', space=vmem, size = 0x12000, scoped, tag = 'internal scratch']
  %s0 = inlined_call_operand.vmem [shape: f32[2,5120], index: 0, kind: input, shape index: {}]
  %s1 = inlined_call_operand.vmem [shape: f32[3328,32], index: 1, kind: input, shape index: {}]
  %s2 = inlined_call_operand.vmem [shape: f32[1,32], index: 2, kind: input, shape index: {}]
  %s3 = inlined_call_operand.hbm [shape: f32[2,32], index: 3, kind: output, shape index: {}]
  %s4 = sld [smem:[#allocation0]]
  $region22: #{temporal_pooling_spk.1} parent=0
    _
  %s6 = ssub.s32 1, %s4
  %s7 = scalar_select 0, %s6, %s4
  $region1: #{temporal_pooling_spk.1} parent=0
    #allocation2 [shape = 'u8[1024]{0}', space=vmem, size = 0x400, scoped, tag = 'output window, operand 0, single buffered']
    #allocation3 [shape = 's32[1]{0}', space=sflag, size = 0x4, scoped, tag = 'scoped memory for temporal_pooling_spk.1']
    %8 = vsyncpa [#allocation3], 0
    // Predicated region
    $region2: #{temporal_pooling_spk.1} parent=1 // pred_check
      _
    $region3: #{temporal_pooling_spk.1} parent=1 // pred_check_branch
      %10 = sbr.rel (0) target = $region5
    $region4: #{temporal_pooling_spk.1} parent=1 // pred_region
      _
    $region5: #{temporal_pooling_spk.1} parent=1 // pred_fallthru
      _
    // Predicated region
    $region6: #{temporal_pooling_spk.1} parent=1 // pred_check
      _
    $region7: #{temporal_pooling_spk.1} parent=1 // pred_check_branch
      %12 = sbr.rel (0) target = $region9
    $region8: #{temporal_pooling_spk.1} parent=1 // pred_region
      _
    $region9: #{temporal_pooling_spk.1} parent=1 // pred_fallthru
      _
    // Predicated region
    $region10: #{temporal_pooling_spk.1} parent=1 // pred_check
      _
    $region11: #{temporal_pooling_spk.1} parent=1 // pred_check_branch
      %14 = sbr.rel (0) target = $region13
    $region12: #{temporal_pooling_spk.1} parent=1 // pred_region
      _
    $region13: #{temporal_pooling_spk.1} parent=1 // pred_fallthru
      _
    %v15 = vld [vmem:[%s0] sm:$0xff]
    %v16 = vld [vmem:[%s0 + $0x8] sm:$0xff]
    %v17 = vld [vmem:[%s0 + $0x10] sm:$0xff]
    %v18 = vld [vmem:[%s0 + $0x18] sm:$0xff]
    %v19 = vld [vmem:[%s0 + $0x20] sm:$0xff]
    %v20 = vld [vmem:[%s0 + $0x28] sm:$0xff]
    %v21 = vld [vmem:[%s0 + $0x30] sm:$0xf]
    %v22 = vld [vmem:[%s1] sm:$0xff]
    %v23 = vld [vmem:[%s1 + $0x8] sm:$0xff]
    %v24 = vld [vmem:[%s1 + $0x10] sm:$0xff]
    %v25 = vld [vmem:[%s1 + $0x18] sm:$0xff]
    %v26 = vld [vmem:[%s1 + $0x20] sm:$0xff]
    %v27 = vld [vmem:[%s1 + $0x28] sm:$0xff]
    %v28 = vld [vmem:[%s1 + $0x30] sm:$0xff]
    %v29 = vld [vmem:[%s1 + $0x38] sm:$0xff]
    %v30 = vld [vmem:[%s1 + $0x40] sm:$0xff]
    %v31 = vld [vmem:[%s1 + $0x48] sm:$0xff]
    %v32 = vld [vmem:[%s1 + $0x50] sm:$0xff]
    %v33 = vld [vmem:[%s1 + $0x58] sm:$0xff]
    %v34 = vld [vmem:[%s1 + $0x60] sm:$0xff]
    %v35 = vld [vmem:[%s1 + $0x68] sm:$0xff]
    %v36 = vld [vmem:[%s1 + $0x70] sm:$0xff]
    %v37 = vld [vmem:[%s1 + $0x78] sm:$0xff]
    %v38 = vld [vmem:[%s1 + $0x80] sm:$0xff]
    %v39 = vld [vmem:[%s1 + $0x88] sm:$0xff]
    %v40 = vld [vmem:[%s1 + $0x90] sm:$0xff]
    %v41 = vld [vmem:[%s1 + $0x98] sm:$0xff]
    %v42 = vld [vmem:[%s1 + $0xa0] sm:$0xff]
    %v43 = vld [vmem:[%s1 + $0xa8] sm:$0xff]
    %v44 = vld [vmem:[%s1 + $0xb0] sm:$0xff]
    %v45 = vld [vmem:[%s1 + $0xb8] sm:$0xff]
    %v46 = vld [vmem:[%s1 + $0xc0] sm:$0xff]
    %v47 = vld [vmem:[%s1 + $0xc8] sm:$0xff]
    %v48 = vld [vmem:[%s1 + $0xd0] sm:$0xff]
    %v49 = vld [vmem:[%s1 + $0xd8] sm:$0xff]
    %v50 = vld [vmem:[%s1 + $0xe0] sm:$0xff]
    %v51 = vld [vmem:[%s1 + $0xe8] sm:$0xff]
    %v52 = vld [vmem:[%s1 + $0xf0] sm:$0xff]
    %v53 = vld [vmem:[%s1 + $0xf8] sm:$0xff]
    %v54 = vld [vmem:[%s1 + $0x100] sm:$0xff]
    %v55 = vld [vmem:[%s1 + $0x108] sm:$0xff]
    %v56 = vld [vmem:[%s1 + $0x110] sm:$0xff]
    %v57 = vld [vmem:[%s1 + $0x118] sm:$0xff]
    %v58 = vld [vmem:[%s1 + $0x120] sm:$0xff]
    %v59 = vld [vmem:[%s1 + $0x128] sm:$0xff]
    %v60 = vld [vmem:[%s1 + $0x130] sm:$0xff]
    %v61 = vld [vmem:[%s1 + $0x138] sm:$0xff]
    %v62 = vld [vmem:[%s1 + $0x140] sm:$0xff]
    %v63 = vld [vmem:[%s1 + $0x148] sm:$0xff]
    %v64 = vld [vmem:[%s1 + $0x150] sm:$0xff]
    %v65 = vld [vmem:[%s1 + $0x158] sm:$0xff]
    %v66 = vld [vmem:[%s1 + $0x160] sm:$0xff]
    %v67 = vld [vmem:[%s1 + $0x168] sm:$0xff]
    %v68 = vld [vmem:[%s1 + $0x170] sm:$0xff]
    %v69 = vld [vmem:[%s1 + $0x178] sm:$0xff]
    %v70 = vld [vmem:[%s1 + $0x180] sm:$0xff]
    %v71 = vld [vmem:[%s1 + $0x188] sm:$0xff]
    %v72 = vld [vmem:[%s1 + $0x190] sm:$0xff]
    %v73 = vld [vmem:[%s1 + $0x198] sm:$0xff]
    %v74 = vld [vmem:[%s1 + $0x1a0] sm:$0xff]
    %v75 = vld [vmem:[%s1 + $0x1a8] sm:$0xff]
    %v76 = vld [vmem:[%s1 + $0x1b0] sm:$0xff]
    %v77 = vld [vmem:[%s1 + $0x1b8] sm:$0xff]
    %v78 = vld [vmem:[%s1 + $0x1c0] sm:$0xff]
    %v79 = vld [vmem:[%s1 + $0x1c8] sm:$0xff]
    %v80 = vld [vmem:[%s1 + $0x1d0] sm:$0xff]
    %v81 = vld [vmem:[%s1 + $0x1d8] sm:$0xff]
    %v82 = vld [vmem:[%s1 + $0x1e0] sm:$0xff]
    %v83 = vld [vmem:[%s1 + $0x1e8] sm:$0xff]
    %v84 = vld [vmem:[%s1 + $0x1f0] sm:$0xff]
    %v85 = vld [vmem:[%s1 + $0x1f8] sm:$0xff]
    %v86 = vld [vmem:[%s1 + $0x200] sm:$0xff]
    %v87 = vld [vmem:[%s1 + $0x208] sm:$0xff]
    %v88 = vld [vmem:[%s1 + $0x210] sm:$0xff]
    %v89 = vld [vmem:[%s1 + $0x218] sm:$0xff]
    %v90 = vld [vmem:[%s1 + $0x220] sm:$0xff]
    %v91 = vld [vmem:[%s1 + $0x228] sm:$0xff]
    %v92 = vld [vmem:[%s1 + $0x230] sm:$0xff]
    %v93 = vld [vmem:[%s1 + $0x238] sm:$0xff]
    %v94 = vld [vmem:[%s1 + $0x240] sm:$0xff]
    %v95 = vld [vmem:[%s1 + $0x248] sm:$0xff]
    %v96 = vld [vmem:[%s1 + $0x250] sm:$0xff]
    %v97 = vld [vmem:[%s1 + $0x258] sm:$0xff]
    %v98 = vld [vmem:[%s1 + $0x260] sm:$0xff]
    %v99 = vld [vmem:[%s1 + $0x268] sm:$0xff]
    %v100 = vld [vmem:[%s1 + $0x270] sm:$0xff]
    %v101 = vld [vmem:[%s1 + $0x278] sm:$0xff]
    %v102 = vld [vmem:[%s1 + $0x280] sm:$0xff]
    %v103 = vld [vmem:[%s1 + $0x288] sm:$0xff]
    %v104 = vld [vmem:[%s1 + $0x290] sm:$0xff]
    %v105 = vld [vmem:[%s1 + $0x298] sm:$0xff]
    %v106 = vld [vmem:[%s1 + $0x2a0] sm:$0xff]
    %v107 = vld [vmem:[%s1 + $0x2a8] sm:$0xff]
    %v108 = vld [vmem:[%s1 + $0x2b0] sm:$0xff]
    %v109 = vld [vmem:[%s1 + $0x2b8] sm:$0xff]
    %v110 = vld [vmem:[%s1 + $0x2c0] sm:$0xff]
    %v111 = vld [vmem:[%s1 + $0x2c8] sm:$0xff]
    %v112 = vld [vmem:[%s1 + $0x2d0] sm:$0xff]
    %v113 = vld [vmem:[%s1 + $0x2d8] sm:$0xff]
    %v114 = vld [vmem:[%s1 + $0x2e0] sm:$0xff]
    %v115 = vld [vmem:[%s1 + $0x2e8] sm:$0xff]
    %v116 = vld [vmem:[%s1 + $0x2f0] sm:$0xff]
    %v117 = vld [vmem:[%s1 + $0x2f8] sm:$0xff]
    %v118 = vld [vmem:[%s1 + $0x300] sm:$0xff]
    %v119 = vld [vmem:[%s1 + $0x308] sm:$0xff]
    %v120 = vld [vmem:[%s1 + $0x310] sm:$0xff]
    %v121 = vld [vmem:[%s1 + $0x318] sm:$0xff]
    %v122 = vld [vmem:[%s1 + $0x320] sm:$0xff]
    %v123 = vld [vmem:[%s1 + $0x328] sm:$0xff]
    %v124 = vld [vmem:[%s1 + $0x330] sm:$0xff]
    %v125 = vld [vmem:[%s1 + $0x338] sm:$0xff]
    %v126 = vld [vmem:[%s1 + $0x340] sm:$0xff]
    %v127 = vld [vmem:[%s1 + $0x348] sm:$0xff]
    %v128 = vld [vmem:[%s1 + $0x350] sm:$0xff]
    %v129 = vld [vmem:[%s1 + $0x358] sm:$0xff]
    %v130 = vld [vmem:[%s1 + $0x360] sm:$0xff]
    %v131 = vld [vmem:[%s1 + $0x368] sm:$0xff]
    %v132 = vld [vmem:[%s1 + $0x370] sm:$0xff]
    %v133 = vld [vmem:[%s1 + $0x378] sm:$0xff]
    %v134 = vld [vmem:[%s1 + $0x380] sm:$0xff]
    %v135 = vld [vmem:[%s1 + $0x388] sm:$0xff]
    %v136 = vld [vmem:[%s1 + $0x390] sm:$0xff]
    %v137 = vld [vmem:[%s1 + $0x398] sm:$0xff]
    %v138 = vld [vmem:[%s1 + $0x3a0] sm:$0xff]
    %v139 = vld [vmem:[%s1 + $0x3a8] sm:$0xff]
    %v140 = vld [vmem:[%s1 + $0x3b0] sm:$0xff]
    %v141 = vld [vmem:[%s1 + $0x3b8] sm:$0xff]
    %v142 = vld [vmem:[%s1 + $0x3c0] sm:$0xff]
    %v143 = vld [vmem:[%s1 + $0x3c8] sm:$0xff]
    %v144 = vld [vmem:[%s1 + $0x3d0] sm:$0xff]
    %v145 = vld [vmem:[%s1 + $0x3d8] sm:$0xff]
    %v146 = vld [vmem:[%s1 + $0x3e0] sm:$0xff]
    %v147 = vld [vmem:[%s1 + $0x3e8] sm:$0xff]
    %v148 = vld [vmem:[%s1 + $0x3f0] sm:$0xff]
    %v149 = vld [vmem:[%s1 + $0x3f8] sm:$0xff]
    %v150 = vld [vmem:[%s1 + $0x400] sm:$0xff]
    %v151 = vld [vmem:[%s1 + $0x408] sm:$0xff]
    %v152 = vld [vmem:[%s1 + $0x410] sm:$0xff]
    %v153 = vld [vmem:[%s1 + $0x418] sm:$0xff]
    %v154 = vld [vmem:[%s1 + $0x420] sm:$0xff]
    %v155 = vld [vmem:[%s1 + $0x428] sm:$0xff]
    %v156 = vld [vmem:[%s1 + $0x430] sm:$0xff]
    %v157 = vld [vmem:[%s1 + $0x438] sm:$0xff]
    %v158 = vld [vmem:[%s1 + $0x440] sm:$0xff]
    %v159 = vld [vmem:[%s1 + $0x448] sm:$0xff]
    %v160 = vld [vmem:[%s1 + $0x450] sm:$0xff]
    %v161 = vld [vmem:[%s1 + $0x458] sm:$0xff]
    %v162 = vld [vmem:[%s1 + $0x460] sm:$0xff]
    %v163 = vld [vmem:[%s1 + $0x468] sm:$0xff]
    %v164 = vld [vmem:[%s1 + $0x470] sm:$0xff]
    %v165 = vld [vmem:[%s1 + $0x478] sm:$0xff]
    %v166 = vld [vmem:[%s1 + $0x480] sm:$0xff]
    %v167 = vld [vmem:[%s1 + $0x488] sm:$0xff]
    %v168 = vld [vmem:[%s1 + $0x490] sm:$0xff]
    %v169 = vld [vmem:[%s1 + $0x498] sm:$0xff]
    %v170 = vld [vmem:[%s1 + $0x4a0] sm:$0xff]
    %v171 = vld [vmem:[%s1 + $0x4a8] sm:$0xff]
    %v172 = vld [vmem:[%s1 + $0x4b0] sm:$0xff]
    %v173 = vld [vmem:[%s1 + $0x4b8] sm:$0xff]
    %v174 = vld [vmem:[%s1 + $0x4c0] sm:$0xff]
    %v175 = vld [vmem:[%s1 + $0x4c8] sm:$0xff]
    %v176 = vld [vmem:[%s1 + $0x4d0] sm:$0xff]
    %v177 = vld [vmem:[%s1 + $0x4d8] sm:$0xff]
    %v178 = vld [vmem:[%s1 + $0x4e0] sm:$0xff]
    %v179 = vld [vmem:[%s1 + $0x4e8] sm:$0xff]
    %v180 = vld [vmem:[%s1 + $0x4f0] sm:$0xff]
    %v181 = vld [vmem:[%s1 + $0x4f8] sm:$0xff]
    %v182 = vld [vmem:[%s1 + $0x500] sm:$0xff]
    %v183 = vld [vmem:[%s1 + $0x508] sm:$0xff]
    %v184 = vld [vmem:[%s1 + $0x510] sm:$0xff]
    %v185 = vld [vmem:[%s1 + $0x518] sm:$0xff]
    %v186 = vld [vmem:[%s1 + $0x520] sm:$0xff]
    %v187 = vld [vmem:[%s1 + $0x528] sm:$0xff]
    %v188 = vld [vmem:[%s1 + $0x530] sm:$0xff]
    %v189 = vld [vmem:[%s1 + $0x538] sm:$0xff]
    %v190 = vld [vmem:[%s1 + $0x540] sm:$0xff]
    %v191 = vld [vmem:[%s1 + $0x548] sm:$0xff]
    %v192 = vld [vmem:[%s1 + $0x550] sm:$0xff]
    %v193 = vld [vmem:[%s1 + $0x558] sm:$0xff]
    %v194 = vld [vmem:[%s1 + $0x560] sm:$0xff]
    %v195 = vld [vmem:[%s1 + $0x568] sm:$0xff]
    %v196 = vld [vmem:[%s1 + $0x570] sm:$0xff]
    %v197 = vld [vmem:[%s1 + $0x578] sm:$0xff]
    %v198 = vld [vmem:[%s1 + $0x580] sm:$0xff]
    %v199 = vld [vmem:[%s1 + $0x588] sm:$0xff]
    %v200 = vld [vmem:[%s1 + $0x590] sm:$0xff]
    %v201 = vld [vmem:[%s1 + $0x598] sm:$0xff]
    %v202 = vld [vmem:[%s1 + $0x5a0] sm:$0xff]
    %v203 = vld [vmem:[%s1 + $0x5a8] sm:$0xff]
    %v204 = vld [vmem:[%s1 + $0x5b0] sm:$0xff]
    %v205 = vld [vmem:[%s1 + $0x5b8] sm:$0xff]
    %v206 = vld [vmem:[%s1 + $0x5c0] sm:$0xff]
    %v207 = vld [vmem:[%s1 + $0x5c8] sm:$0xff]
    %v208 = vld [vmem:[%s1 + $0x5d0] sm:$0xff]
    %v209 = vld [vmem:[%s1 + $0x5d8] sm:$0xff]
    %v210 = vld [vmem:[%s1 + $0x5e0] sm:$0xff]
    %v211 = vld [vmem:[%s1 + $0x5e8] sm:$0xff]
    %v212 = vld [vmem:[%s1 + $0x5f0] sm:$0xff]
    %v213 = vld [vmem:[%s1 + $0x5f8] sm:$0xff]
    %v214 = vld [vmem:[%s1 + $0x600] sm:$0xff]
    %v215 = vld [vmem:[%s1 + $0x608] sm:$0xff]
    %v216 = vld [vmem:[%s1 + $0x610] sm:$0xff]
    %v217 = vld [vmem:[%s1 + $0x618] sm:$0xff]
    %v218 = vld [vmem:[%s1 + $0x620] sm:$0xff]
    %v219 = vld [vmem:[%s1 + $0x628] sm:$0xff]
    %v220 = vld [vmem:[%s1 + $0x630] sm:$0xff]
    %v221 = vld [vmem:[%s1 + $0x638] sm:$0xff]
    %v222 = vld [vmem:[%s1 + $0x640] sm:$0xff]
    %v223 = vld [vmem:[%s1 + $0x648] sm:$0xff]
    %v224 = vld [vmem:[%s1 + $0x650] sm:$0xff]
    %v225 = vld [vmem:[%s1 + $0x658] sm:$0xff]
    %v226 = vld [vmem:[%s1 + $0x660] sm:$0xff]
    %v227 = vld [vmem:[%s1 + $0x668] sm:$0xff]
    %v228 = vld [vmem:[%s1 + $0x670] sm:$0xff]
    %v229 = vld [vmem:[%s1 + $0x678] sm:$0xff]
    %v230 = vld [vmem:[%s1 + $0x680] sm:$0xff]
    %v231 = vld [vmem:[%s1 + $0x688] sm:$0xff]
    %v232 = vld [vmem:[%s1 + $0x690] sm:$0xff]
    %v233 = vld [vmem:[%s1 + $0x698] sm:$0xff]
    %v234 = vld [vmem:[%s1 + $0x6a0] sm:$0xff]
    %v235 = vld [vmem:[%s1 + $0x6a8] sm:$0xff]
    %v236 = vld [vmem:[%s1 + $0x6b0] sm:$0xff]
    %v237 = vld [vmem:[%s1 + $0x6b8] sm:$0xff]
    %v238 = vld [vmem:[%s1 + $0x6c0] sm:$0xff]
    %v239 = vld [vmem:[%s1 + $0x6c8] sm:$0xff]
    %v240 = vld [vmem:[%s1 + $0x6d0] sm:$0xff]
    %v241 = vld [vmem:[%s1 + $0x6d8] sm:$0xff]
    %v242 = vld [vmem:[%s1 + $0x6e0] sm:$0xff]
    %v243 = vld [vmem:[%s1 + $0x6e8] sm:$0xff]
    %v244 = vld [vmem:[%s1 + $0x6f0] sm:$0xff]
    %v245 = vld [vmem:[%s1 + $0x6f8] sm:$0xff]
    %v246 = vld [vmem:[%s1 + $0x700] sm:$0xff]
    %v247 = vld [vmem:[%s1 + $0x708] sm:$0xff]
    %v248 = vld [vmem:[%s1 + $0x710] sm:$0xff]
    %v249 = vld [vmem:[%s1 + $0x718] sm:$0xff]
    %v250 = vld [vmem:[%s1 + $0x720] sm:$0xff]
    %v251 = vld [vmem:[%s1 + $0x728] sm:$0xff]
    %v252 = vld [vmem:[%s1 + $0x730] sm:$0xff]
    %v253 = vld [vmem:[%s1 + $0x738] sm:$0xff]
    %v254 = vld [vmem:[%s1 + $0x740] sm:$0xff]
    %v255 = vld [vmem:[%s1 + $0x748] sm:$0xff]
    %v256 = vld [vmem:[%s1 + $0x750] sm:$0xff]
    %v257 = vld [vmem:[%s1 + $0x758] sm:$0xff]
    %v258 = vld [vmem:[%s1 + $0x760] sm:$0xff]
    %v259 = vld [vmem:[%s1 + $0x768] sm:$0xff]
    %v260 = vld [vmem:[%s1 + $0x770] sm:$0xff]
    %v261 = vld [vmem:[%s1 + $0x778] sm:$0xff]
    %v262 = vld [vmem:[%s1 + $0x780] sm:$0xff]
    %v263 = vld [vmem:[%s1 + $0x788] sm:$0xff]
    %v264 = vld [vmem:[%s1 + $0x790] sm:$0xff]
    %v265 = vld [vmem:[%s1 + $0x798] sm:$0xff]
    %v266 = vld [vmem:[%s1 + $0x7a0] sm:$0xff]
    %v267 = vld [vmem:[%s1 + $0x7a8] sm:$0xff]
    %v268 = vld [vmem:[%s1 + $0x7b0] sm:$0xff]
    %v269 = vld [vmem:[%s1 + $0x7b8] sm:$0xff]
    %v270 = vld [vmem:[%s1 + $0x7c0] sm:$0xff]
    %v271 = vld [vmem:[%s1 + $0x7c8] sm:$0xff]
    %v272 = vld [vmem:[%s1 + $0x7d0] sm:$0xff]
    %v273 = vld [vmem:[%s1 + $0x7d8] sm:$0xff]
    %v274 = vld [vmem:[%s1 + $0x7e0] sm:$0xff]
    %v275 = vld [vmem:[%s1 + $0x7e8] sm:$0xff]
    %v276 = vld [vmem:[%s1 + $0x7f0] sm:$0xff]
    %v277 = vld [vmem:[%s1 + $0x7f8] sm:$0xff]
    %v278 = vld [vmem:[%s1 + $0x800] sm:$0xff]
    %v279 = vld [vmem:[%s1 + $0x808] sm:$0xff]
    %v280 = vld [vmem:[%s1 + $0x810] sm:$0xff]
    %v281 = vld [vmem:[%s1 + $0x818] sm:$0xff]
    %v282 = vld [vmem:[%s1 + $0x820] sm:$0xff]
    %v283 = vld [vmem:[%s1 + $0x828] sm:$0xff]
    %v284 = vld [vmem:[%s1 + $0x830] sm:$0xff]
    %v285 = vld [vmem:[%s1 + $0x838] sm:$0xff]
    %v286 = vld [vmem:[%s1 + $0x840] sm:$0xff]
    %v287 = vld [vmem:[%s1 + $0x848] sm:$0xff]
    %v288 = vld [vmem:[%s1 + $0x850] sm:$0xff]
    %v289 = vld [vmem:[%s1 + $0x858] sm:$0xff]
    %v290 = vld [vmem:[%s1 + $0x860] sm:$0xff]
    %v291 = vld [vmem:[%s1 + $0x868] sm:$0xff]
    %v292 = vld [vmem:[%s1 + $0x870] sm:$0xff]
    %v293 = vld [vmem:[%s1 + $0x878] sm:$0xff]
    %v294 = vld [vmem:[%s1 + $0x880] sm:$0xff]
    %v295 = vld [vmem:[%s1 + $0x888] sm:$0xff]
    %v296 = vld [vmem:[%s1 + $0x890] sm:$0xff]
    %v297 = vld [vmem:[%s1 + $0x898] sm:$0xff]
    %v298 = vld [vmem:[%s1 + $0x8a0] sm:$0xff]
    %v299 = vld [vmem:[%s1 + $0x8a8] sm:$0xff]
    %v300 = vld [vmem:[%s1 + $0x8b0] sm:$0xff]
    %v301 = vld [vmem:[%s1 + $0x8b8] sm:$0xff]
    %v302 = vld [vmem:[%s1 + $0x8c0] sm:$0xff]
    %v303 = vld [vmem:[%s1 + $0x8c8] sm:$0xff]
    %v304 = vld [vmem:[%s1 + $0x8d0] sm:$0xff]
    %v305 = vld [vmem:[%s1 + $0x8d8] sm:$0xff]
    %v306 = vld [vmem:[%s1 + $0x8e0] sm:$0xff]
    %v307 = vld [vmem:[%s1 + $0x8e8] sm:$0xff]
    %v308 = vld [vmem:[%s1 + $0x8f0] sm:$0xff]
    %v309 = vld [vmem:[%s1 + $0x8f8] sm:$0xff]
    %v310 = vld [vmem:[%s1 + $0x900] sm:$0xff]
    %v311 = vld [vmem:[%s1 + $0x908] sm:$0xff]
    %v312 = vld [vmem:[%s1 + $0x910] sm:$0xff]
    %v313 = vld [vmem:[%s1 + $0x918] sm:$0xff]
    %v314 = vld [vmem:[%s1 + $0x920] sm:$0xff]
    %v315 = vld [vmem:[%s1 + $0x928] sm:$0xff]
    %v316 = vld [vmem:[%s1 + $0x930] sm:$0xff]
    %v317 = vld [vmem:[%s1 + $0x938] sm:$0xff]
    %v318 = vld [vmem:[%s1 + $0x940] sm:$0xff]
    %v319 = vld [vmem:[%s1 + $0x948] sm:$0xff]
    %v320 = vld [vmem:[%s1 + $0x950] sm:$0xff]
    %v321 = vld [vmem:[%s1 + $0x958] sm:$0xff]
    %v322 = vld [vmem:[%s1 + $0x960] sm:$0xff]
    %v323 = vld [vmem:[%s1 + $0x968] sm:$0xff]
    %v324 = vld [vmem:[%s1 + $0x970] sm:$0xff]
    %v325 = vld [vmem:[%s1 + $0x978] sm:$0xff]
    %v326 = vld [vmem:[%s1 + $0x980] sm:$0xff]
    %v327 = vld [vmem:[%s1 + $0x988] sm:$0xff]
    %v328 = vld [vmem:[%s1 + $0x990] sm:$0xff]
    %v329 = vld [vmem:[%s1 + $0x998] sm:$0xff]
    %v330 = vld [vmem:[%s1 + $0x9a0] sm:$0xff]
    %v331 = vld [vmem:[%s1 + $0x9a8] sm:$0xff]
    %v332 = vld [vmem:[%s1 + $0x9b0] sm:$0xff]
    %v333 = vld [vmem:[%s1 + $0x9b8] sm:$0xff]
    %v334 = vld [vmem:[%s1 + $0x9c0] sm:$0xff]
    %v335 = vld [vmem:[%s1 + $0x9c8] sm:$0xff]
    %v336 = vld [vmem:[%s1 + $0x9d0] sm:$0xff]
    %v337 = vld [vmem:[%s1 + $0x9d8] sm:$0xff]
    %v338 = vld [vmem:[%s1 + $0x9e0] sm:$0xff]
    %v339 = vld [vmem:[%s1 + $0x9e8] sm:$0xff]
    %v340 = vld [vmem:[%s1 + $0x9f0] sm:$0xff]
    %v341 = vld [vmem:[%s1 + $0x9f8] sm:$0xff]
    %v342 = vld [vmem:[%s1 + $0xa00] sm:$0xff]
    %v343 = vld [vmem:[%s1 + $0xa08] sm:$0xff]
    %v344 = vld [vmem:[%s1 + $0xa10] sm:$0xff]
    %v345 = vld [vmem:[%s1 + $0xa18] sm:$0xff]
    %v346 = vld [vmem:[%s1 + $0xa20] sm:$0xff]
    %v347 = vld [vmem:[%s1 + $0xa28] sm:$0xff]
    %v348 = vld [vmem:[%s1 + $0xa30] sm:$0xff]
    %v349 = vld [vmem:[%s1 + $0xa38] sm:$0xff]
    %v350 = vld [vmem:[%s1 + $0xa40] sm:$0xff]
    %v351 = vld [vmem:[%s1 + $0xa48] sm:$0xff]
    %v352 = vld [vmem:[%s1 + $0xa50] sm:$0xff]
    %v353 = vld [vmem:[%s1 + $0xa58] sm:$0xff]
    %v354 = vld [vmem:[%s1 + $0xa60] sm:$0xff]
    %v355 = vld [vmem:[%s1 + $0xa68] sm:$0xff]
    %v356 = vld [vmem:[%s1 + $0xa70] sm:$0xff]
    %v357 = vld [vmem:[%s1 + $0xa78] sm:$0xff]
    %v358 = vld [vmem:[%s1 + $0xa80] sm:$0xff]
    %v359 = vld [vmem:[%s1 + $0xa88] sm:$0xff]
    %v360 = vld [vmem:[%s1 + $0xa90] sm:$0xff]
    %v361 = vld [vmem:[%s1 + $0xa98] sm:$0xff]
    %v362 = vld [vmem:[%s1 + $0xaa0] sm:$0xff]
    %v363 = vld [vmem:[%s1 + $0xaa8] sm:$0xff]
    %v364 = vld [vmem:[%s1 + $0xab0] sm:$0xff]
    %v365 = vld [vmem:[%s1 + $0xab8] sm:$0xff]
    %v366 = vld [vmem:[%s1 + $0xac0] sm:$0xff]
    %v367 = vld [vmem:[%s1 + $0xac8] sm:$0xff]
    %v368 = vld [vmem:[%s1 + $0xad0] sm:$0xff]
    %v369 = vld [vmem:[%s1 + $0xad8] sm:$0xff]
    %v370 = vld [vmem:[%s1 + $0xae0] sm:$0xff]
    %v371 = vld [vmem:[%s1 + $0xae8] sm:$0xff]
    %v372 = vld [vmem:[%s1 + $0xaf0] sm:$0xff]
    %v373 = vld [vmem:[%s1 + $0xaf8] sm:$0xff]
    %v374 = vld [vmem:[%s1 + $0xb00] sm:$0xff]
    %v375 = vld [vmem:[%s1 + $0xb08] sm:$0xff]
    %v376 = vld [vmem:[%s1 + $0xb10] sm:$0xff]
    %v377 = vld [vmem:[%s1 + $0xb18] sm:$0xff]
    %v378 = vld [vmem:[%s1 + $0xb20] sm:$0xff]
    %v379 = vld [vmem:[%s1 + $0xb28] sm:$0xff]
    %v380 = vld [vmem:[%s1 + $0xb30] sm:$0xff]
    %v381 = vld [vmem:[%s1 + $0xb38] sm:$0xff]
    %v382 = vld [vmem:[%s1 + $0xb40] sm:$0xff]
    %v383 = vld [vmem:[%s1 + $0xb48] sm:$0xff]
    %v384 = vld [vmem:[%s1 + $0xb50] sm:$0xff]
    %v385 = vld [vmem:[%s1 + $0xb58] sm:$0xff]
    %v386 = vld [vmem:[%s1 + $0xb60] sm:$0xff]
    %v387 = vld [vmem:[%s1 + $0xb68] sm:$0xff]
    %v388 = vld [vmem:[%s1 + $0xb70] sm:$0xff]
    %v389 = vld [vmem:[%s1 + $0xb78] sm:$0xff]
    %v390 = vld [vmem:[%s1 + $0xb80] sm:$0xff]
    %v391 = vld [vmem:[%s1 + $0xb88] sm:$0xff]
    %v392 = vld [vmem:[%s1 + $0xb90] sm:$0xff]
    %v393 = vld [vmem:[%s1 + $0xb98] sm:$0xff]
    %v394 = vld [vmem:[%s1 + $0xba0] sm:$0xff]
    %v395 = vld [vmem:[%s1 + $0xba8] sm:$0xff]
    %v396 = vld [vmem:[%s1 + $0xbb0] sm:$0xff]
    %v397 = vld [vmem:[%s1 + $0xbb8] sm:$0xff]
    %v398 = vld [vmem:[%s1 + $0xbc0] sm:$0xff]
    %v399 = vld [vmem:[%s1 + $0xbc8] sm:$0xff]
    %v400 = vld [vmem:[%s1 + $0xbd0] sm:$0xff]
    %v401 = vld [vmem:[%s1 + $0xbd8] sm:$0xff]
    %v402 = vld [vmem:[%s1 + $0xbe0] sm:$0xff]
    %v403 = vld [vmem:[%s1 + $0xbe8] sm:$0xff]
    %v404 = vld [vmem:[%s1 + $0xbf0] sm:$0xff]
    %v405 = vld [vmem:[%s1 + $0xbf8] sm:$0xff]
    %v406 = vld [vmem:[%s1 + $0xc00] sm:$0xff]
    %v407 = vld [vmem:[%s1 + $0xc08] sm:$0xff]
    %v408 = vld [vmem:[%s1 + $0xc10] sm:$0xff]
    %v409 = vld [vmem:[%s1 + $0xc18] sm:$0xff]
    %v410 = vld [vmem:[%s1 + $0xc20] sm:$0xff]
    %v411 = vld [vmem:[%s1 + $0xc28] sm:$0xff]
    %v412 = vld [vmem:[%s1 + $0xc30] sm:$0xff]
    %v413 = vld [vmem:[%s1 + $0xc38] sm:$0xff]
    %v414 = vld [vmem:[%s1 + $0xc40] sm:$0xff]
    %v415 = vld [vmem:[%s1 + $0xc48] sm:$0xff]
    %v416 = vld [vmem:[%s1 + $0xc50] sm:$0xff]
    %v417 = vld [vmem:[%s1 + $0xc58] sm:$0xff]
    %v418 = vld [vmem:[%s1 + $0xc60] sm:$0xff]
    %v419 = vld [vmem:[%s1 + $0xc68] sm:$0xff]
    %v420 = vld [vmem:[%s1 + $0xc70] sm:$0xff]
    %v421 = vld [vmem:[%s1 + $0xc78] sm:$0xff]
    %v422 = vld [vmem:[%s1 + $0xc80] sm:$0xff]
    %v423 = vld [vmem:[%s1 + $0xc88] sm:$0xff]
    %v424 = vld [vmem:[%s1 + $0xc90] sm:$0xff]
    %v425 = vld [vmem:[%s1 + $0xc98] sm:$0xff]
    %v426 = vld [vmem:[%s1 + $0xca0] sm:$0xff]
    %v427 = vld [vmem:[%s1 + $0xca8] sm:$0xff]
    %v428 = vld [vmem:[%s1 + $0xcb0] sm:$0xff]
    %v429 = vld [vmem:[%s1 + $0xcb8] sm:$0xff]
    %v430 = vld [vmem:[%s1 + $0xcc0] sm:$0xff]
    %v431 = vld [vmem:[%s1 + $0xcc8] sm:$0xff]
    %v432 = vld [vmem:[%s1 + $0xcd0] sm:$0xff]
    %v433 = vld [vmem:[%s1 + $0xcd8] sm:$0xff]
    %v434 = vld [vmem:[%s1 + $0xce0] sm:$0xff]
    %v435 = vld [vmem:[%s1 + $0xce8] sm:$0xff]
    %v436 = vld [vmem:[%s1 + $0xcf0] sm:$0xff]
    %v437 = vld [vmem:[%s1 + $0xcf8] sm:$0xff]
    %v438 = vld [vmem:[%s2] sm:$0x1]
    %v440 = vlaneseq
    %v441 = vshrl.u32 %v440, 7
    %v442 = vsub.s32 0, %v441
    %v443 = vrot.slane %v438, %v442
    %v452 = vcombine.high %v15, %v15
    %v454 = vunpack.c.l.s4 1983009808
    %v455 = vunpack.c.0.s8 %v454
    %v456 = vlaneseq
    %v457 = vshrl.u32 %v456, 7
    %v458 = vsub.s32 %v455, %v457
    %v459 = vrot.slane %v15, %v458
    %v461 = vunpack.c.l.s4 1983009808
    %v462 = vunpack.c.0.s8 %v461
    %v463 = vlaneseq
    %v464 = vshrl.u32 %v463, 7
    %v465 = vsub.s32 %v462, %v464
    %v466 = vrot.slane %v452, %v465
    %v467 = vcombine.high %v459, %v459
    %v468 = vcombine.high %v466, %v466
    %v469 = vcombine.high %v16, %v16
    %v471 = vunpack.c.l.s4 1983009808
    %v472 = vunpack.c.0.s8 %v471
    %v473 = vlaneseq
    %v474 = vshrl.u32 %v473, 7
    %v475 = vsub.s32 %v472, %v474
    %v476 = vrot.slane %v16, %v475
    %v478 = vunpack.c.l.s4 1983009808
    %v479 = vunpack.c.0.s8 %v478
    %v480 = vlaneseq
    %v481 = vshrl.u32 %v480, 7
    %v482 = vsub.s32 %v479, %v481
    %v483 = vrot.slane %v469, %v482
    %v484 = vcombine.high %v476, %v476
    %v485 = vcombine.high %v483, %v483
    %v486 = vcombine.high %v17, %v17
    %v488 = vunpack.c.l.s4 1983009808
    %v489 = vunpack.c.0.s8 %v488
    %v490 = vlaneseq
    %v491 = vshrl.u32 %v490, 7
    %v492 = vsub.s32 %v489, %v491
    %v493 = vrot.slane %v17, %v492
    %v495 = vunpack.c.l.s4 1983009808
    %v496 = vunpack.c.0.s8 %v495
    %v497 = vlaneseq
    %v498 = vshrl.u32 %v497, 7
    %v499 = vsub.s32 %v496, %v498
    %v500 = vrot.slane %v486, %v499
    %v501 = vcombine.high %v493, %v493
    %v502 = vcombine.high %v500, %v500
    %v503 = vcombine.high %v18, %v18
    %v505 = vunpack.c.l.s4 1983009808
    %v506 = vunpack.c.0.s8 %v505
    %v507 = vlaneseq
    %v508 = vshrl.u32 %v507, 7
    %v509 = vsub.s32 %v506, %v508
    %v510 = vrot.slane %v18, %v509
    %v512 = vunpack.c.l.s4 1983009808
    %v513 = vunpack.c.0.s8 %v512
    %v514 = vlaneseq
    %v515 = vshrl.u32 %v514, 7
    %v516 = vsub.s32 %v513, %v515
    %v517 = vrot.slane %v503, %v516
    %v518 = vcombine.high %v510, %v510
    %v519 = vcombine.high %v517, %v517
    %v520 = vcombine.high %v19, %v19
    %v522 = vunpack.c.l.s4 1983009808
    %v523 = vunpack.c.0.s8 %v522
    %v524 = vlaneseq
    %v525 = vshrl.u32 %v524, 7
    %v526 = vsub.s32 %v523, %v525
    %v527 = vrot.slane %v19, %v526
    %v529 = vunpack.c.l.s4 1983009808
    %v530 = vunpack.c.0.s8 %v529
    %v531 = vlaneseq
    %v532 = vshrl.u32 %v531, 7
    %v533 = vsub.s32 %v530, %v532
    %v534 = vrot.slane %v520, %v533
    %v535 = vcombine.high %v527, %v527
    %v536 = vcombine.high %v534, %v534
    %v537 = vcombine.high %v20, %v20
    %v539 = vunpack.c.l.s4 1983009808
    %v540 = vunpack.c.0.s8 %v539
    %v541 = vlaneseq
    %v542 = vshrl.u32 %v541, 7
    %v543 = vsub.s32 %v540, %v542
    %v544 = vrot.slane %v20, %v543
    %v546 = vunpack.c.l.s4 1983009808
    %v547 = vunpack.c.0.s8 %v546
    %v548 = vlaneseq
    %v549 = vshrl.u32 %v548, 7
    %v550 = vsub.s32 %v547, %v549
    %v551 = vrot.slane %v537, %v550
    %v552 = vcombine.high %v544, %v544
    %v553 = vcombine.high %v551, %v551
    %v555 = vunpack.c.l.s4 1983009808
    %v556 = vunpack.c.0.s8 %v555
    %v557 = vlaneseq
    %v558 = vshrl.u32 %v557, 7
    %v559 = vsub.s32 %v556, %v558
    %v560 = vrot.slane %v21, %v559
    %v561 = vcombine.high %v560, %v560
    %588 = vmatprep.subr.mxu0 0.0
    %589 = vmatpush1.msra.mxu0 %v22
    %590 = vmatprep.subr.mxu0 0.0
    %591 = vmatpush1.msra.mxu0 %v23
    %592 = vmatprep.subr.mxu0 0.0
    %593 = vmatpush1.msra.mxu0 %v24
    %594 = vmatprep.subr.mxu0 0.0
    %595 = vmatpush1.msra.mxu0 %v25
    %596 = vmatprep.subr.mxu0 0.0
    %597 = vmatpush1.msra.mxu0 %v26
    %598 = vmatprep.subr.mxu0 0.0
    %599 = vmatpush1.msra.mxu0 %v27
    %600 = vmatprep.subr.mxu0 0.0
    %601 = vmatpush1.msra.mxu0 %v28
    %602 = vmatprep.subr.mxu0 0.0
    %603 = vmatpush1.msra.mxu0 %v29
    %604 = vmatprep.subr.mxu0 0.0
    %605 = vmatpush1.msra.mxu0 %v30
    %606 = vmatprep.subr.mxu0 0.0
    %607 = vmatpush1.msra.mxu0 %v31
    %608 = vmatprep.subr.mxu0 0.0
    %609 = vmatpush1.msra.mxu0 %v32
    %610 = vmatprep.subr.mxu0 0.0
    %611 = vmatpush1.msra.mxu0 %v33
    %612 = vmatprep.subr.mxu0 0.0
    %613 = vmatpush1.msra.mxu0 %v34
    %614 = vmatprep.subr.mxu0 0.0
    %615 = vmatpush1.msra.mxu0 %v35
    %616 = vmatprep.subr.mxu0 0.0
    %617 = vmatpush1.msra.mxu0 %v36
    %618 = vmatprep.subr.mxu0 0.0
    %619 = vmatpush1.msra.mxu0 %v37
    %620 = vmatprep.subr.mxu0 0.0
    %621 = vmatpush1.msra.mxu0 %v38
    %622 = vmatprep.subr.mxu0 0.0
    %623 = vmatpush1.msra.mxu0 %v39
    %624 = vmatprep.subr.mxu0 0.0
    %625 = vmatpush1.msra.mxu0 %v40
    %626 = vmatprep.subr.mxu0 0.0
    %627 = vmatpush1.msra.mxu0 %v41
    %628 = vmatprep.subr.mxu0 0.0
    %629 = vmatpush1.msra.mxu0 %v42
    %630 = vmatprep.subr.mxu0 0.0
    %631 = vmatpush1.msra.mxu0 %v43
    %632 = vmatprep.subr.mxu0 0.0
    %633 = vmatpush1.msra.mxu0 %v44
    %634 = vmatprep.subr.mxu0 0.0
    %635 = vmatpush1.msra.mxu0 %v45
    %636 = vmatprep.subr.mxu0 0.0
    %637 = vmatpush1.msra.mxu0 %v46
    %638 = vmatprep.subr.mxu0 0.0
    %639 = vmatpush1.msra.mxu0 %v47
    %640 = vmatprep.subr.mxu0 0.0
    %641 = vmatpush1.msra.mxu0 %v48
    %642 = vmatprep.subr.mxu0 0.0
    %643 = vmatpush1.msra.mxu0 %v49
    %644 = vmatprep.subr.mxu0 0.0
    %645 = vmatpush1.msra.mxu0 %v50
    %646 = vmatprep.subr.mxu0 0.0
    %647 = vmatpush1.msra.mxu0 %v51
    %648 = vmatprep.subr.mxu0 0.0
    %649 = vmatpush1.msra.mxu0 %v52
    %650 = vmatprep.subr.mxu0 0.0
    %651 = vmatpush1.msra.mxu0 %v53
    %652 = vmatprep.mubr.f32.mxu0 %v467
    %653 = vmatmul.mubr.f32.gmra.mrb[0].mxu0 %v459
    %v654 = vpop.f32.mrb[0].mxu0
    %v655 = vadd.f32 %v443, %v654
    %v656 = vpop.f32.mrb[0].mxu0
    %657 = vdwg.mxu0
    %658 = vmatprep.subr.mxu0 0.0
    %659 = vmatpush1.msra.mxu0 %v54
    %660 = vmatprep.subr.mxu0 0.0
    %661 = vmatpush1.msra.mxu0 %v55
    %662 = vmatprep.subr.mxu0 0.0
    %663 = vmatpush1.msra.mxu0 %v56
    %664 = vmatprep.subr.mxu0 0.0
    %665 = vmatpush1.msra.mxu0 %v57
    %666 = vmatprep.subr.mxu0 0.0
    %667 = vmatpush1.msra.mxu0 %v58
    %668 = vmatprep.subr.mxu0 0.0
    %669 = vmatpush1.msra.mxu0 %v59
    %670 = vmatprep.subr.mxu0 0.0
    %671 = vmatpush1.msra.mxu0 %v60
    %672 = vmatprep.subr.mxu0 0.0
    %673 = vmatpush1.msra.mxu0 %v61
    %674 = vmatprep.subr.mxu0 0.0
    %675 = vmatpush1.msra.mxu0 %v62
    %676 = vmatprep.subr.mxu0 0.0
    %677 = vmatpush1.msra.mxu0 %v63
    %678 = vmatprep.subr.mxu0 0.0
    %679 = vmatpush1.msra.mxu0 %v64
    %680 = vmatprep.subr.mxu0 0.0
    %681 = vmatpush1.msra.mxu0 %v65
    %682 = vmatprep.subr.mxu0 0.0
    %683 = vmatpush1.msra.mxu0 %v66
    %684 = vmatprep.subr.mxu0 0.0
    %685 = vmatpush1.msra.mxu0 %v67
    %686 = vmatprep.subr.mxu0 0.0
    %687 = vmatpush1.msra.mxu0 %v68
    %688 = vmatprep.subr.mxu0 0.0
    %689 = vmatpush1.msra.mxu0 %v69
    %690 = vmatprep.subr.mxu0 0.0
    %691 = vmatpush1.msra.mxu0 %v70
    %692 = vmatprep.subr.mxu0 0.0
    %693 = vmatpush1.msra.mxu0 %v71
    %694 = vmatprep.subr.mxu0 0.0
    %695 = vmatpush1.msra.mxu0 %v72
    %696 = vmatprep.subr.mxu0 0.0
    %697 = vmatpush1.msra.mxu0 %v73
    %698 = vmatprep.subr.mxu0 0.0
    %699 = vmatpush1.msra.mxu0 %v74
    %700 = vmatprep.subr.mxu0 0.0
    %701 = vmatpush1.msra.mxu0 %v75
    %702 = vmatprep.subr.mxu0 0.0
    %703 = vmatpush1.msra.mxu0 %v76
    %704 = vmatprep.subr.mxu0 0.0
    %705 = vmatpush1.msra.mxu0 %v77
    %706 = vmatprep.subr.mxu0 0.0
    %707 = vmatpush1.msra.mxu0 %v78
    %708 = vmatprep.subr.mxu0 0.0
    %709 = vmatpush1.msra.mxu0 %v79
    %710 = vmatprep.subr.mxu0 0.0
    %711 = vmatpush1.msra.mxu0 %v80
    %712 = vmatprep.subr.mxu0 0.0
    %713 = vmatpush1.msra.mxu0 %v81
    %714 = vmatprep.subr.mxu0 0.0
    %715 = vmatpush1.msra.mxu0 %v82
    %716 = vmatprep.subr.mxu0 0.0
    %717 = vmatpush1.msra.mxu0 %v83
    %718 = vmatprep.subr.mxu0 0.0
    %719 = vmatpush1.msra.mxu0 %v84
    %720 = vmatprep.subr.mxu0 0.0
    %721 = vmatpush1.msra.mxu0 %v85
    %722 = vmatprep.mubr.f32.mxu0 %v468
    %723 = vmatmul.mubr.f32.gmra.mrb[0].mxu0 %v466
    %v724 = vpop.f32.mrb[0].mxu0
    %v725 = vadd.f32 %v655, %v724
    %v726 = vpop.f32.mrb[0].mxu0
    %727 = vdwg.mxu0
    %728 = vmatprep.subr.mxu0 0.0
    %729 = vmatpush1.msra.mxu0 %v86
    %730 = vmatprep.subr.mxu0 0.0
    %731 = vmatpush1.msra.mxu0 %v87
    %732 = vmatprep.subr.mxu0 0.0
    %733 = vmatpush1.msra.mxu0 %v88
    %734 = vmatprep.subr.mxu0 0.0
    %735 = vmatpush1.msra.mxu0 %v89
    %736 = vmatprep.subr.mxu0 0.0
    %737 = vmatpush1.msra.mxu0 %v90
    %738 = vmatprep.subr.mxu0 0.0
    %739 = vmatpush1.msra.mxu0 %v91
    %740 = vmatprep.subr.mxu0 0.0
    %741 = vmatpush1.msra.mxu0 %v92
    %742 = vmatprep.subr.mxu0 0.0
    %743 = vmatpush1.msra.mxu0 %v93
    %744 = vmatprep.subr.mxu0 0.0
    %745 = vmatpush1.msra.mxu0 %v94
    %746 = vmatprep.subr.mxu0 0.0
    %747 = vmatpush1.msra.mxu0 %v95
    %748 = vmatprep.subr.mxu0 0.0
    %749 = vmatpush1.msra.mxu0 %v96
    %750 = vmatprep.subr.mxu0 0.0
    %751 = vmatpush1.msra.mxu0 %v97
    %752 = vmatprep.subr.mxu0 0.0
    %753 = vmatpush1.msra.mxu0 %v98
    %754 = vmatprep.subr.mxu0 0.0
    %755 = vmatpush1.msra.mxu0 %v99
    %756 = vmatprep.subr.mxu0 0.0
    %757 = vmatpush1.msra.mxu0 %v100
    %758 = vmatprep.subr.mxu0 0.0
    %759 = vmatpush1.msra.mxu0 %v101
    %760 = vmatprep.subr.mxu0 0.0
    %761 = vmatpush1.msra.mxu0 %v102
    %762 = vmatprep.subr.mxu0 0.0
    %763 = vmatpush1.msra.mxu0 %v103
    %764 = vmatprep.subr.mxu0 0.0
    %765 = vmatpush1.msra.mxu0 %v104
    %766 = vmatprep.subr.mxu0 0.0
    %767 = vmatpush1.msra.mxu0 %v105
    %768 = vmatprep.subr.mxu0 0.0
    %769 = vmatpush1.msra.mxu0 %v106
    %770 = vmatprep.subr.mxu0 0.0
    %771 = vmatpush1.msra.mxu0 %v107
    %772 = vmatprep.subr.mxu0 0.0
    %773 = vmatpush1.msra.mxu0 %v108
    %774 = vmatprep.subr.mxu0 0.0
    %775 = vmatpush1.msra.mxu0 %v109
    %776 = vmatprep.subr.mxu0 0.0
    %777 = vmatpush1.msra.mxu0 %v110
    %778 = vmatprep.subr.mxu0 0.0
    %779 = vmatpush1.msra.mxu0 %v111
    %780 = vmatprep.subr.mxu0 0.0
    %781 = vmatpush1.msra.mxu0 %v112
    %782 = vmatprep.subr.mxu0 0.0
    %783 = vmatpush1.msra.mxu0 %v113
    %784 = vmatprep.subr.mxu0 0.0
    %785 = vmatpush1.msra.mxu0 %v114
    %786 = vmatprep.subr.mxu0 0.0
    %787 = vmatpush1.msra.mxu0 %v115
    %788 = vmatprep.subr.mxu0 0.0
    %789 = vmatpush1.msra.mxu0 %v116
    %790 = vmatprep.subr.mxu0 0.0
    %791 = vmatpush1.msra.mxu0 %v117
    %792 = vmatprep.mubr.f32.mxu0 %v484
    %793 = vmatmul.mubr.f32.gmra.mrb[0].mxu0 %v476
    %v794 = vpop.f32.mrb[0].mxu0
    %v795 = vadd.f32 %v725, %v794
    %v796 = vpop.f32.mrb[0].mxu0
    %797 = vdwg.mxu0
    %798 = vmatprep.subr.mxu0 0.0
    %799 = vmatpush1.msra.mxu0 %v118
    %800 = vmatprep.subr.mxu0 0.0
    %801 = vmatpush1.msra.mxu0 %v119
    %802 = vmatprep.subr.mxu0 0.0
    %803 = vmatpush1.msra.mxu0 %v120
    %804 = vmatprep.subr.mxu0 0.0
    %805 = vmatpush1.msra.mxu0 %v121
    %806 = vmatprep.subr.mxu0 0.0
    %807 = vmatpush1.msra.mxu0 %v122
    %808 = vmatprep.subr.mxu0 0.0
    %809 = vmatpush1.msra.mxu0 %v123
    %810 = vmatprep.subr.mxu0 0.0
    %811 = vmatpush1.msra.mxu0 %v124
    %812 = vmatprep.subr.mxu0 0.0
    %813 = vmatpush1.msra.mxu0 %v125
    %814 = vmatprep.subr.mxu0 0.0
    %815 = vmatpush1.msra.mxu0 %v126
    %816 = vmatprep.subr.mxu0 0.0
    %817 = vmatpush1.msra.mxu0 %v127
    %818 = vmatprep.subr.mxu0 0.0
    %819 = vmatpush1.msra.mxu0 %v128
    %820 = vmatprep.subr.mxu0 0.0
    %821 = vmatpush1.msra.mxu0 %v129
    %822 = vmatprep.subr.mxu0 0.0
    %823 = vmatpush1.msra.mxu0 %v130
    %824 = vmatprep.subr.mxu0 0.0
    %825 = vmatpush1.msra.mxu0 %v131
    %826 = vmatprep.subr.mxu0 0.0
    %827 = vmatpush1.msra.mxu0 %v132
    %828 = vmatprep.subr.mxu0 0.0
    %829 = vmatpush1.msra.mxu0 %v133
    %830 = vmatprep.subr.mxu0 0.0
    %831 = vmatpush1.msra.mxu0 %v134
    %832 = vmatprep.subr.mxu0 0.0
    %833 = vmatpush1.msra.mxu0 %v135
    %834 = vmatprep.subr.mxu0 0.0
    %835 = vmatpush1.msra.mxu0 %v136
    %836 = vmatprep.subr.mxu0 0.0
    %837 = vmatpush1.msra.mxu0 %v137
    %838 = vmatprep.subr.mxu0 0.0
    %839 = vmatpush1.msra.mxu0 %v138
    %840 = vmatprep.subr.mxu0 0.0
    %841 = vmatpush1.msra.mxu0 %v139
    %842 = vmatprep.subr.mxu0 0.0
    %843 = vmatpush1.msra.mxu0 %v140
    %844 = vmatprep.subr.mxu0 0.0
    %845 = vmatpush1.msra.mxu0 %v141
    %846 = vmatprep.subr.mxu0 0.0
    %847 = vmatpush1.msra.mxu0 %v142
    %848 = vmatprep.subr.mxu0 0.0
    %849 = vmatpush1.msra.mxu0 %v143
    %850 = vmatprep.subr.mxu0 0.0
    %851 = vmatpush1.msra.mxu0 %v144
    %852 = vmatprep.subr.mxu0 0.0
    %853 = vmatpush1.msra.mxu0 %v145
    %854 = vmatprep.subr.mxu0 0.0
    %855 = vmatpush1.msra.mxu0 %v146
    %856 = vmatprep.subr.mxu0 0.0
    %857 = vmatpush1.msra.mxu0 %v147
    %858 = vmatprep.subr.mxu0 0.0
    %859 = vmatpush1.msra.mxu0 %v148
    %860 = vmatprep.subr.mxu0 0.0
    %861 = vmatpush1.msra.mxu0 %v149
    %862 = vmatprep.mubr.f32.mxu0 %v485
    %863 = vmatmul.mubr.f32.gmra.mrb[0].mxu0 %v483
    %v864 = vpop.f32.mrb[0].mxu0
    %v865 = vadd.f32 %v795, %v864
    %v866 = vpop.f32.mrb[0].mxu0
    %867 = vdwg.mxu0
    %868 = vmatprep.subr.mxu0 0.0
    %869 = vmatpush1.msra.mxu0 %v150
    %870 = vmatprep.subr.mxu0 0.0
    %871 = vmatpush1.msra.mxu0 %v151
    %872 = vmatprep.subr.mxu0 0.0
    %873 = vmatpush1.msra.mxu0 %v152
    %874 = vmatprep.subr.mxu0 0.0
    %875 = vmatpush1.msra.mxu0 %v153
    %876 = vmatprep.subr.mxu0 0.0
    %877 = vmatpush1.msra.mxu0 %v154
    %878 = vmatprep.subr.mxu0 0.0
    %879 = vmatpush1.msra.mxu0 %v155
    %880 = vmatprep.subr.mxu0 0.0
    %881 = vmatpush1.msra.mxu0 %v156
    %882 = vmatprep.subr.mxu0 0.0
    %883 = vmatpush1.msra.mxu0 %v157
    %884 = vmatprep.subr.mxu0 0.0
    %885 = vmatpush1.msra.mxu0 %v158
    %886 = vmatprep.subr.mxu0 0.0
    %887 = vmatpush1.msra.mxu0 %v159
    %888 = vmatprep.subr.mxu0 0.0
    %889 = vmatpush1.msra.mxu0 %v160
    %890 = vmatprep.subr.mxu0 0.0
    %891 = vmatpush1.msra.mxu0 %v161
    %892 = vmatprep.subr.mxu0 0.0
    %893 = vmatpush1.msra.mxu0 %v162
    %894 = vmatprep.subr.mxu0 0.0
    %895 = vmatpush1.msra.mxu0 %v163
    %896 = vmatprep.subr.mxu0 0.0
    %897 = vmatpush1.msra.mxu0 %v164
    %898 = vmatprep.subr.mxu0 0.0
    %899 = vmatpush1.msra.mxu0 %v165
    %900 = vmatprep.subr.mxu0 0.0
    %901 = vmatpush1.msra.mxu0 %v166
    %902 = vmatprep.subr.mxu0 0.0
    %903 = vmatpush1.msra.mxu0 %v167
    %904 = vmatprep.subr.mxu0 0.0
    %905 = vmatpush1.msra.mxu0 %v168
    %906 = vmatprep.subr.mxu0 0.0
    %907 = vmatpush1.msra.mxu0 %v169
    %908 = vmatprep.subr.mxu0 0.0
    %909 = vmatpush1.msra.mxu0 %v170
    %910 = vmatprep.subr.mxu0 0.0
    %911 = vmatpush1.msra.mxu0 %v171
    %912 = vmatprep.subr.mxu0 0.0
    %913 = vmatpush1.msra.mxu0 %v172
    %914 = vmatprep.subr.mxu0 0.0
    %915 = vmatpush1.msra.mxu0 %v173
    %916 = vmatprep.subr.mxu0 0.0
    %917 = vmatpush1.msra.mxu0 %v174
    %918 = vmatprep.subr.mxu0 0.0
    %919 = vmatpush1.msra.mxu0 %v175
    %920 = vmatprep.subr.mxu0 0.0
    %921 = vmatpush1.msra.mxu0 %v176
    %922 = vmatprep.subr.mxu0 0.0
    %923 = vmatpush1.msra.mxu0 %v177
    %924 = vmatprep.subr.mxu0 0.0
    %925 = vmatpush1.msra.mxu0 %v178
    %926 = vmatprep.subr.mxu0 0.0
    %927 = vmatpush1.msra.mxu0 %v179
    %928 = vmatprep.subr.mxu0 0.0
    %929 = vmatpush1.msra.mxu0 %v180
    %930 = vmatprep.subr.mxu0 0.0
    %931 = vmatpush1.msra.mxu0 %v181
    %932 = vmatprep.mubr.f32.mxu0 %v501
    %933 = vmatmul.mubr.f32.gmra.mrb[0].mxu0 %v493
    %v934 = vpop.f32.mrb[0].mxu0
    %v935 = vadd.f32 %v865, %v934
    %v936 = vpop.f32.mrb[0].mxu0
    %937 = vdwg.mxu0
    %938 = vmatprep.subr.mxu0 0.0
    %939 = vmatpush1.msra.mxu0 %v182
    %940 = vmatprep.subr.mxu0 0.0
    %941 = vmatpush1.msra.mxu0 %v183
    %942 = vmatprep.subr.mxu0 0.0
    %943 = vmatpush1.msra.mxu0 %v184
    %944 = vmatprep.subr.mxu0 0.0
    %945 = vmatpush1.msra.mxu0 %v185
    %946 = vmatprep.subr.mxu0 0.0
    %947 = vmatpush1.msra.mxu0 %v186
    %948 = vmatprep.subr.mxu0 0.0
    %949 = vmatpush1.msra.mxu0 %v187
    %950 = vmatprep.subr.mxu0 0.0
    %951 = vmatpush1.msra.mxu0 %v188
    %952 = vmatprep.subr.mxu0 0.0
    %953 = vmatpush1.msra.mxu0 %v189
    %954 = vmatprep.subr.mxu0 0.0
    %955 = vmatpush1.msra.mxu0 %v190
    %956 = vmatprep.subr.mxu0 0.0
    %957 = vmatpush1.msra.mxu0 %v191
    %958 = vmatprep.subr.mxu0 0.0
    %959 = vmatpush1.msra.mxu0 %v192
    %960 = vmatprep.subr.mxu0 0.0
    %961 = vmatpush1.msra.mxu0 %v193
    %962 = vmatprep.subr.mxu0 0.0
    %963 = vmatpush1.msra.mxu0 %v194
    %964 = vmatprep.subr.mxu0 0.0
    %965 = vmatpush1.msra.mxu0 %v195
    %966 = vmatprep.subr.mxu0 0.0
    %967 = vmatpush1.msra.mxu0 %v196
    %968 = vmatprep.subr.mxu0 0.0
    %969 = vmatpush1.msra.mxu0 %v197
    %970 = vmatprep.subr.mxu0 0.0
    %971 = vmatpush1.msra.mxu0 %v198
    %972 = vmatprep.subr.mxu0 0.0
    %973 = vmatpush1.msra.mxu0 %v199
    %974 = vmatprep.subr.mxu0 0.0
    %975 = vmatpush1.msra.mxu0 %v200
    %976 = vmatprep.subr.mxu0 0.0
    %977 = vmatpush1.msra.mxu0 %v201
    %978 = vmatprep.subr.mxu0 0.0
    %979 = vmatpush1.msra.mxu0 %v202
    %980 = vmatprep.subr.mxu0 0.0
    %981 = vmatpush1.msra.mxu0 %v203
    %982 = vmatprep.subr.mxu0 0.0
    %983 = vmatpush1.msra.mxu0 %v204
    %984 = vmatprep.subr.mxu0 0.0
    %985 = vmatpush1.msra.mxu0 %v205
    %986 = vmatprep.subr.mxu0 0.0
    %987 = vmatpush1.msra.mxu0 %v206
    %988 = vmatprep.subr.mxu0 0.0
    %989 = vmatpush1.msra.mxu0 %v207
    %990 = vmatprep.subr.mxu0 0.0
    %991 = vmatpush1.msra.mxu0 %v208
    %992 = vmatprep.subr.mxu0 0.0
    %993 = vmatpush1.msra.mxu0 %v209
    %994 = vmatprep.subr.mxu0 0.0
    %995 = vmatpush1.msra.mxu0 %v210
    %996 = vmatprep.subr.mxu0 0.0
    %997 = vmatpush1.msra.mxu0 %v211
    %998 = vmatprep.subr.mxu0 0.0
    %999 = vmatpush1.msra.mxu0 %v212
    %1000 = vmatprep.subr.mxu0 0.0
    %1001 = vmatpush1.msra.mxu0 %v213
    %1002 = vmatprep.mubr.f32.mxu0 %v502
    %1003 = vmatmul.mubr.f32.gmra.mrb[0].mxu0 %v500
    %v1004 = vpop.f32.mrb[0].mxu0
    %v1005 = vadd.f32 %v935, %v1004
    %v1006 = vpop.f32.mrb[0].mxu0
    %1007 = vdwg.mxu0
    %1008 = vmatprep.subr.mxu0 0.0
    %1009 = vmatpush1.msra.mxu0 %v214
    %1010 = vmatprep.subr.mxu0 0.0
    %1011 = vmatpush1.msra.mxu0 %v215
    %1012 = vmatprep.subr.mxu0 0.0
    %1013 = vmatpush1.msra.mxu0 %v216
    %1014 = vmatprep.subr.mxu0 0.0
    %1015 = vmatpush1.msra.mxu0 %v217
    %1016 = vmatprep.subr.mxu0 0.0
    %1017 = vmatpush1.msra.mxu0 %v218
    %1018 = vmatprep.subr.mxu0 0.0
    %1019 = vmatpush1.msra.mxu0 %v219
    %1020 = vmatprep.subr.mxu0 0.0
    %1021 = vmatpush1.msra.mxu0 %v220
    %1022 = vmatprep.subr.mxu0 0.0
    %1023 = vmatpush1.msra.mxu0 %v221
    %1024 = vmatprep.subr.mxu0 0.0
    %1025 = vmatpush1.msra.mxu0 %v222
    %1026 = vmatprep.subr.mxu0 0.0
    %1027 = vmatpush1.msra.mxu0 %v223
    %1028 = vmatprep.subr.mxu0 0.0
    %1029 = vmatpush1.msra.mxu0 %v224
    %1030 = vmatprep.subr.mxu0 0.0
    %1031 = vmatpush1.msra.mxu0 %v225
    %1032 = vmatprep.subr.mxu0 0.0
    %1033 = vmatpush1.msra.mxu0 %v226
    %1034 = vmatprep.subr.mxu0 0.0
    %1035 = vmatpush1.msra.mxu0 %v227
    %1036 = vmatprep.subr.mxu0 0.0
    %1037 = vmatpush1.msra.mxu0 %v228
    %1038 = vmatprep.subr.mxu0 0.0
    %1039 = vmatpush1.msra.mxu0 %v229
    %1040 = vmatprep.subr.mxu0 0.0
    %1041 = vmatpush1.msra.mxu0 %v230
    %1042 = vmatprep.subr.mxu0 0.0
    %1043 = vmatpush1.msra.mxu0 %v231
    %1044 = vmatprep.subr.mxu0 0.0
    %1045 = vmatpush1.msra.mxu0 %v232
    %1046 = vmatprep.subr.mxu0 0.0
    %1047 = vmatpush1.msra.mxu0 %v233
    %1048 = vmatprep.subr.mxu0 0.0
    %1049 = vmatpush1.msra.mxu0 %v234
    %1050 = vmatprep.subr.mxu0 0.0
    %1051 = vmatpush1.msra.mxu0 %v235
    %1052 = vmatprep.subr.mxu0 0.0
    %1053 = vmatpush1.msra.mxu0 %v236
    %1054 = vmatprep.subr.mxu0 0.0
    %1055 = vmatpush1.msra.mxu0 %v237
    %1056 = vmatprep.subr.mxu0 0.0
    %1057 = vmatpush1.msra.mxu0 %v238
    %1058 = vmatprep.subr.mxu0 0.0
    %1059 = vmatpush1.msra.mxu0 %v239
    %1060 = vmatprep.subr.mxu0 0.0
    %1061 = vmatpush1.msra.mxu0 %v240
    %1062 = vmatprep.subr.mxu0 0.0
    %1063 = vmatpush1.msra.mxu0 %v241
    %1064 = vmatprep.subr.mxu0 0.0
    %1065 = vmatpush1.msra.mxu0 %v242
    %1066 = vmatprep.subr.mxu0 0.0
    %1067 = vmatpush1.msra.mxu0 %v243
    %1068 = vmatprep.subr.mxu0 0.0
    %1069 = vmatpush1.msra.mxu0 %v244
    %1070 = vmatprep.subr.mxu0 0.0
    %1071 = vmatpush1.msra.mxu0 %v245
    %1072 = vmatprep.mubr.f32.mxu0 %v518
    %1073 = vmatmul.mubr.f32.gmra.mrb[0].mxu0 %v510
    %v1074 = vpop.f32.mrb[0].mxu0
    %v1075 = vadd.f32 %v1005, %v1074
    %v1076 = vpop.f32.mrb[0].mxu0
    %1077 = vdwg.mxu0
    %1078 = vmatprep.subr.mxu0 0.0
    %1079 = vmatpush1.msra.mxu0 %v246
    %1080 = vmatprep.subr.mxu0 0.0
    %1081 = vmatpush1.msra.mxu0 %v247
    %1082 = vmatprep.subr.mxu0 0.0
    %1083 = vmatpush1.msra.mxu0 %v248
    %1084 = vmatprep.subr.mxu0 0.0
    %1085 = vmatpush1.msra.mxu0 %v249
    %1086 = vmatprep.subr.mxu0 0.0
    %1087 = vmatpush1.msra.mxu0 %v250
    %1088 = vmatprep.subr.mxu0 0.0
    %1089 = vmatpush1.msra.mxu0 %v251
    %1090 = vmatprep.subr.mxu0 0.0
    %1091 = vmatpush1.msra.mxu0 %v252
    %1092 = vmatprep.subr.mxu0 0.0
    %1093 = vmatpush1.msra.mxu0 %v253
    %1094 = vmatprep.subr.mxu0 0.0
    %1095 = vmatpush1.msra.mxu0 %v254
    %1096 = vmatprep.subr.mxu0 0.0
    %1097 = vmatpush1.msra.mxu0 %v255
    %1098 = vmatprep.subr.mxu0 0.0
    %1099 = vmatpush1.msra.mxu0 %v256
    %1100 = vmatprep.subr.mxu0 0.0
    %1101 = vmatpush1.msra.mxu0 %v257
    %1102 = vmatprep.subr.mxu0 0.0
    %1103 = vmatpush1.msra.mxu0 %v258
    %1104 = vmatprep.subr.mxu0 0.0
    %1105 = vmatpush1.msra.mxu0 %v259
    %1106 = vmatprep.subr.mxu0 0.0
    %1107 = vmatpush1.msra.mxu0 %v260
    %1108 = vmatprep.subr.mxu0 0.0
    %1109 = vmatpush1.msra.mxu0 %v261
    %1110 = vmatprep.subr.mxu0 0.0
    %1111 = vmatpush1.msra.mxu0 %v262
    %1112 = vmatprep.subr.mxu0 0.0
    %1113 = vmatpush1.msra.mxu0 %v263
    %1114 = vmatprep.subr.mxu0 0.0
    %1115 = vmatpush1.msra.mxu0 %v264
    %1116 = vmatprep.subr.mxu0 0.0
    %1117 = vmatpush1.msra.mxu0 %v265
    %1118 = vmatprep.subr.mxu0 0.0
    %1119 = vmatpush1.msra.mxu0 %v266
    %1120 = vmatprep.subr.mxu0 0.0
    %1121 = vmatpush1.msra.mxu0 %v267
    %1122 = vmatprep.subr.mxu0 0.0
    %1123 = vmatpush1.msra.mxu0 %v268
    %1124 = vmatprep.subr.mxu0 0.0
    %1125 = vmatpush1.msra.mxu0 %v269
    %1126 = vmatprep.subr.mxu0 0.0
    %1127 = vmatpush1.msra.mxu0 %v270
    %1128 = vmatprep.subr.mxu0 0.0
    %1129 = vmatpush1.msra.mxu0 %v271
    %1130 = vmatprep.subr.mxu0 0.0
    %1131 = vmatpush1.msra.mxu0 %v272
    %1132 = vmatprep.subr.mxu0 0.0
    %1133 = vmatpush1.msra.mxu0 %v273
    %1134 = vmatprep.subr.mxu0 0.0
    %1135 = vmatpush1.msra.mxu0 %v274
    %1136 = vmatprep.subr.mxu0 0.0
    %1137 = vmatpush1.msra.mxu0 %v275
    %1138 = vmatprep.subr.mxu0 0.0
    %1139 = vmatpush1.msra.mxu0 %v276
    %1140 = vmatprep.subr.mxu0 0.0
    %1141 = vmatpush1.msra.mxu0 %v277
    %1142 = vmatprep.mubr.f32.mxu0 %v519
    %1143 = vmatmul.mubr.f32.gmra.mrb[0].mxu0 %v517
    %v1144 = vpop.f32.mrb[0].mxu0
    %v1145 = vadd.f32 %v1075, %v1144
    %v1146 = vpop.f32.mrb[0].mxu0
    %1147 = vdwg.mxu0
    %1148 = vmatprep.subr.mxu0 0.0
    %1149 = vmatpush1.msra.mxu0 %v278
    %1150 = vmatprep.subr.mxu0 0.0
    %1151 = vmatpush1.msra.mxu0 %v279
    %1152 = vmatprep.subr.mxu0 0.0
    %1153 = vmatpush1.msra.mxu0 %v280
    %1154 = vmatprep.subr.mxu0 0.0
    %1155 = vmatpush1.msra.mxu0 %v281
    %1156 = vmatprep.subr.mxu0 0.0
    %1157 = vmatpush1.msra.mxu0 %v282
    %1158 = vmatprep.subr.mxu0 0.0
    %1159 = vmatpush1.msra.mxu0 %v283
    %1160 = vmatprep.subr.mxu0 0.0
    %1161 = vmatpush1.msra.mxu0 %v284
    %1162 = vmatprep.subr.mxu0 0.0
    %1163 = vmatpush1.msra.mxu0 %v285
    %1164 = vmatprep.subr.mxu0 0.0
    %1165 = vmatpush1.msra.mxu0 %v286
    %1166 = vmatprep.subr.mxu0 0.0
    %1167 = vmatpush1.msra.mxu0 %v287
    %1168 = vmatprep.subr.mxu0 0.0
    %1169 = vmatpush1.msra.mxu0 %v288
    %1170 = vmatprep.subr.mxu0 0.0
    %1171 = vmatpush1.msra.mxu0 %v289
    %1172 = vmatprep.subr.mxu0 0.0
    %1173 = vmatpush1.msra.mxu0 %v290
    %1174 = vmatprep.subr.mxu0 0.0
    %1175 = vmatpush1.msra.mxu0 %v291
    %1176 = vmatprep.subr.mxu0 0.0
    %1177 = vmatpush1.msra.mxu0 %v292
    %1178 = vmatprep.subr.mxu0 0.0
    %1179 = vmatpush1.msra.mxu0 %v293
    %1180 = vmatprep.subr.mxu0 0.0
    %1181 = vmatpush1.msra.mxu0 %v294
    %1182 = vmatprep.subr.mxu0 0.0
    %1183 = vmatpush1.msra.mxu0 %v295
    %1184 = vmatprep.subr.mxu0 0.0
    %1185 = vmatpush1.msra.mxu0 %v296
    %1186 = vmatprep.subr.mxu0 0.0
    %1187 = vmatpush1.msra.mxu0 %v297
    %1188 = vmatprep.subr.mxu0 0.0
    %1189 = vmatpush1.msra.mxu0 %v298
    %1190 = vmatprep.subr.mxu0 0.0
    %1191 = vmatpush1.msra.mxu0 %v299
    %1192 = vmatprep.subr.mxu0 0.0
    %1193 = vmatpush1.msra.mxu0 %v300
    %1194 = vmatprep.subr.mxu0 0.0
    %1195 = vmatpush1.msra.mxu0 %v301
    %1196 = vmatprep.subr.mxu0 0.0
    %1197 = vmatpush1.msra.mxu0 %v302
    %1198 = vmatprep.subr.mxu0 0.0
    %1199 = vmatpush1.msra.mxu0 %v303
    %1200 = vmatprep.subr.mxu0 0.0
    %1201 = vmatpush1.msra.mxu0 %v304
    %1202 = vmatprep.subr.mxu0 0.0
    %1203 = vmatpush1.msra.mxu0 %v305
    %1204 = vmatprep.subr.mxu0 0.0
    %1205 = vmatpush1.msra.mxu0 %v306
    %1206 = vmatprep.subr.mxu0 0.0
    %1207 = vmatpush1.msra.mxu0 %v307
    %1208 = vmatprep.subr.mxu0 0.0
    %1209 = vmatpush1.msra.mxu0 %v308
    %1210 = vmatprep.subr.mxu0 0.0
    %1211 = vmatpush1.msra.mxu0 %v309
    %1212 = vmatprep.mubr.f32.mxu0 %v535
    %1213 = vmatmul.mubr.f32.gmra.mrb[0].mxu0 %v527
    %v1214 = vpop.f32.mrb[0].mxu0
    %v1215 = vadd.f32 %v1145, %v1214
    %v1216 = vpop.f32.mrb[0].mxu0
    %1217 = vdwg.mxu0
    %1218 = vmatprep.subr.mxu0 0.0
    %1219 = vmatpush1.msra.mxu0 %v310
    %1220 = vmatprep.subr.mxu0 0.0
    %1221 = vmatpush1.msra.mxu0 %v311
    %1222 = vmatprep.subr.mxu0 0.0
    %1223 = vmatpush1.msra.mxu0 %v312
    %1224 = vmatprep.subr.mxu0 0.0
    %1225 = vmatpush1.msra.mxu0 %v313
    %1226 = vmatprep.subr.mxu0 0.0
    %1227 = vmatpush1.msra.mxu0 %v314
    %1228 = vmatprep.subr.mxu0 0.0
    %1229 = vmatpush1.msra.mxu0 %v315
    %1230 = vmatprep.subr.mxu0 0.0
    %1231 = vmatpush1.msra.mxu0 %v316
    %1232 = vmatprep.subr.mxu0 0.0
    %1233 = vmatpush1.msra.mxu0 %v317
    %1234 = vmatprep.subr.mxu0 0.0
    %1235 = vmatpush1.msra.mxu0 %v318
    %1236 = vmatprep.subr.mxu0 0.0
    %1237 = vmatpush1.msra.mxu0 %v319
    %1238 = vmatprep.subr.mxu0 0.0
    %1239 = vmatpush1.msra.mxu0 %v320
    %1240 = vmatprep.subr.mxu0 0.0
    %1241 = vmatpush1.msra.mxu0 %v321
    %1242 = vmatprep.subr.mxu0 0.0
    %1243 = vmatpush1.msra.mxu0 %v322
    %1244 = vmatprep.subr.mxu0 0.0
    %1245 = vmatpush1.msra.mxu0 %v323
    %1246 = vmatprep.subr.mxu0 0.0
    %1247 = vmatpush1.msra.mxu0 %v324
    %1248 = vmatprep.subr.mxu0 0.0
    %1249 = vmatpush1.msra.mxu0 %v325
    %1250 = vmatprep.subr.mxu0 0.0
    %1251 = vmatpush1.msra.mxu0 %v326
    %1252 = vmatprep.subr.mxu0 0.0
    %1253 = vmatpush1.msra.mxu0 %v327
    %1254 = vmatprep.subr.mxu0 0.0
    %1255 = vmatpush1.msra.mxu0 %v328
    %1256 = vmatprep.subr.mxu0 0.0
    %1257 = vmatpush1.msra.mxu0 %v329
    %1258 = vmatprep.subr.mxu0 0.0
    %1259 = vmatpush1.msra.mxu0 %v330
    %1260 = vmatprep.subr.mxu0 0.0
    %1261 = vmatpush1.msra.mxu0 %v331
    %1262 = vmatprep.subr.mxu0 0.0
    %1263 = vmatpush1.msra.mxu0 %v332
    %1264 = vmatprep.subr.mxu0 0.0
    %1265 = vmatpush1.msra.mxu0 %v333
    %1266 = vmatprep.subr.mxu0 0.0
    %1267 = vmatpush1.msra.mxu0 %v334
    %1268 = vmatprep.subr.mxu0 0.0
    %1269 = vmatpush1.msra.mxu0 %v335
    %1270 = vmatprep.subr.mxu0 0.0
    %1271 = vmatpush1.msra.mxu0 %v336
    %1272 = vmatprep.subr.mxu0 0.0
    %1273 = vmatpush1.msra.mxu0 %v337
    %1274 = vmatprep.subr.mxu0 0.0
    %1275 = vmatpush1.msra.mxu0 %v338
    %1276 = vmatprep.subr.mxu0 0.0
    %1277 = vmatpush1.msra.mxu0 %v339
    %1278 = vmatprep.subr.mxu0 0.0
    %1279 = vmatpush1.msra.mxu0 %v340
    %1280 = vmatprep.subr.mxu0 0.0
    %1281 = vmatpush1.msra.mxu0 %v341
    %1282 = vmatprep.mubr.f32.mxu0 %v536
    %1283 = vmatmul.mubr.f32.gmra.mrb[0].mxu0 %v534
    %v1284 = vpop.f32.mrb[0].mxu0
    %v1285 = vadd.f32 %v1215, %v1284
    %v1286 = vpop.f32.mrb[0].mxu0
    %1287 = vdwg.mxu0
    %1288 = vmatprep.subr.mxu0 0.0
    %1289 = vmatpush1.msra.mxu0 %v342
    %1290 = vmatprep.subr.mxu0 0.0
    %1291 = vmatpush1.msra.mxu0 %v343
    %1292 = vmatprep.subr.mxu0 0.0
    %1293 = vmatpush1.msra.mxu0 %v344
    %1294 = vmatprep.subr.mxu0 0.0
    %1295 = vmatpush1.msra.mxu0 %v345
    %1296 = vmatprep.subr.mxu0 0.0
    %1297 = vmatpush1.msra.mxu0 %v346
    %1298 = vmatprep.subr.mxu0 0.0
    %1299 = vmatpush1.msra.mxu0 %v347
    %1300 = vmatprep.subr.mxu0 0.0
    %1301 = vmatpush1.msra.mxu0 %v348
    %1302 = vmatprep.subr.mxu0 0.0
    %1303 = vmatpush1.msra.mxu0 %v349
    %1304 = vmatprep.subr.mxu0 0.0
    %1305 = vmatpush1.msra.mxu0 %v350
    %1306 = vmatprep.subr.mxu0 0.0
    %1307 = vmatpush1.msra.mxu0 %v351
    %1308 = vmatprep.subr.mxu0 0.0
    %1309 = vmatpush1.msra.mxu0 %v352
    %1310 = vmatprep.subr.mxu0 0.0
    %1311 = vmatpush1.msra.mxu0 %v353
    %1312 = vmatprep.subr.mxu0 0.0
    %1313 = vmatpush1.msra.mxu0 %v354
    %1314 = vmatprep.subr.mxu0 0.0
    %1315 = vmatpush1.msra.mxu0 %v355
    %1316 = vmatprep.subr.mxu0 0.0
    %1317 = vmatpush1.msra.mxu0 %v356
    %1318 = vmatprep.subr.mxu0 0.0
    %1319 = vmatpush1.msra.mxu0 %v357
    %1320 = vmatprep.subr.mxu0 0.0
    %1321 = vmatpush1.msra.mxu0 %v358
    %1322 = vmatprep.subr.mxu0 0.0
    %1323 = vmatpush1.msra.mxu0 %v359
    %1324 = vmatprep.subr.mxu0 0.0
    %1325 = vmatpush1.msra.mxu0 %v360
    %1326 = vmatprep.subr.mxu0 0.0
    %1327 = vmatpush1.msra.mxu0 %v361
    %1328 = vmatprep.subr.mxu0 0.0
    %1329 = vmatpush1.msra.mxu0 %v362
    %1330 = vmatprep.subr.mxu0 0.0
    %1331 = vmatpush1.msra.mxu0 %v363
    %1332 = vmatprep.subr.mxu0 0.0
    %1333 = vmatpush1.msra.mxu0 %v364
    %1334 = vmatprep.subr.mxu0 0.0
    %1335 = vmatpush1.msra.mxu0 %v365
    %1336 = vmatprep.subr.mxu0 0.0
    %1337 = vmatpush1.msra.mxu0 %v366
    %1338 = vmatprep.subr.mxu0 0.0
    %1339 = vmatpush1.msra.mxu0 %v367
    %1340 = vmatprep.subr.mxu0 0.0
    %1341 = vmatpush1.msra.mxu0 %v368
    %1342 = vmatprep.subr.mxu0 0.0
    %1343 = vmatpush1.msra.mxu0 %v369
    %1344 = vmatprep.subr.mxu0 0.0
    %1345 = vmatpush1.msra.mxu0 %v370
    %1346 = vmatprep.subr.mxu0 0.0
    %1347 = vmatpush1.msra.mxu0 %v371
    %1348 = vmatprep.subr.mxu0 0.0
    %1349 = vmatpush1.msra.mxu0 %v372
    %1350 = vmatprep.subr.mxu0 0.0
    %1351 = vmatpush1.msra.mxu0 %v373
    %1352 = vmatprep.mubr.f32.mxu0 %v552
    %1353 = vmatmul.mubr.f32.gmra.mrb[0].mxu0 %v544
    %v1354 = vpop.f32.mrb[0].mxu0
    %v1355 = vadd.f32 %v1285, %v1354
    %v1356 = vpop.f32.mrb[0].mxu0
    %1357 = vdwg.mxu0
    %1358 = vmatprep.subr.mxu0 0.0
    %1359 = vmatpush1.msra.mxu0 %v374
    %1360 = vmatprep.subr.mxu0 0.0
    %1361 = vmatpush1.msra.mxu0 %v375
    %1362 = vmatprep.subr.mxu0 0.0
    %1363 = vmatpush1.msra.mxu0 %v376
    %1364 = vmatprep.subr.mxu0 0.0
    %1365 = vmatpush1.msra.mxu0 %v377
    %1366 = vmatprep.subr.mxu0 0.0
    %1367 = vmatpush1.msra.mxu0 %v378
    %1368 = vmatprep.subr.mxu0 0.0
    %1369 = vmatpush1.msra.mxu0 %v379
    %1370 = vmatprep.subr.mxu0 0.0
    %1371 = vmatpush1.msra.mxu0 %v380
    %1372 = vmatprep.subr.mxu0 0.0
    %1373 = vmatpush1.msra.mxu0 %v381
    %1374 = vmatprep.subr.mxu0 0.0
    %1375 = vmatpush1.msra.mxu0 %v382
    %1376 = vmatprep.subr.mxu0 0.0
    %1377 = vmatpush1.msra.mxu0 %v383
    %1378 = vmatprep.subr.mxu0 0.0
    %1379 = vmatpush1.msra.mxu0 %v384
    %1380 = vmatprep.subr.mxu0 0.0
    %1381 = vmatpush1.msra.mxu0 %v385
    %1382 = vmatprep.subr.mxu0 0.0
    %1383 = vmatpush1.msra.mxu0 %v386
    %1384 = vmatprep.subr.mxu0 0.0
    %1385 = vmatpush1.msra.mxu0 %v387
    %1386 = vmatprep.subr.mxu0 0.0
    %1387 = vmatpush1.msra.mxu0 %v388
    %1388 = vmatprep.subr.mxu0 0.0
    %1389 = vmatpush1.msra.mxu0 %v389
    %1390 = vmatprep.subr.mxu0 0.0
    %1391 = vmatpush1.msra.mxu0 %v390
    %1392 = vmatprep.subr.mxu0 0.0
    %1393 = vmatpush1.msra.mxu0 %v391
    %1394 = vmatprep.subr.mxu0 0.0
    %1395 = vmatpush1.msra.mxu0 %v392
    %1396 = vmatprep.subr.mxu0 0.0
    %1397 = vmatpush1.msra.mxu0 %v393
    %1398 = vmatprep.subr.mxu0 0.0
    %1399 = vmatpush1.msra.mxu0 %v394
    %1400 = vmatprep.subr.mxu0 0.0
    %1401 = vmatpush1.msra.mxu0 %v395
    %1402 = vmatprep.subr.mxu0 0.0
    %1403 = vmatpush1.msra.mxu0 %v396
    %1404 = vmatprep.subr.mxu0 0.0
    %1405 = vmatpush1.msra.mxu0 %v397
    %1406 = vmatprep.subr.mxu0 0.0
    %1407 = vmatpush1.msra.mxu0 %v398
    %1408 = vmatprep.subr.mxu0 0.0
    %1409 = vmatpush1.msra.mxu0 %v399
    %1410 = vmatprep.subr.mxu0 0.0
    %1411 = vmatpush1.msra.mxu0 %v400
    %1412 = vmatprep.subr.mxu0 0.0
    %1413 = vmatpush1.msra.mxu0 %v401
    %1414 = vmatprep.subr.mxu0 0.0
    %1415 = vmatpush1.msra.mxu0 %v402
    %1416 = vmatprep.subr.mxu0 0.0
    %1417 = vmatpush1.msra.mxu0 %v403
    %1418 = vmatprep.subr.mxu0 0.0
    %1419 = vmatpush1.msra.mxu0 %v404
    %1420 = vmatprep.subr.mxu0 0.0
    %1421 = vmatpush1.msra.mxu0 %v405
    %1422 = vmatprep.mubr.f32.mxu0 %v553
    %1423 = vmatmul.mubr.f32.gmra.mrb[0].mxu0 %v551
    %v1424 = vpop.f32.mrb[0].mxu0
    %v1425 = vadd.f32 %v1355, %v1424
    %v1426 = vpop.f32.mrb[0].mxu0
    %1427 = vdwg.mxu0
    %1428 = vmatprep.subr.mxu0 0.0
    %1429 = vmatpush1.msra.mxu0 %v406
    %1430 = vmatprep.subr.mxu0 0.0
    %1431 = vmatpush1.msra.mxu0 %v407
    %1432 = vmatprep.subr.mxu0 0.0
    %1433 = vmatpush1.msra.mxu0 %v408
    %1434 = vmatprep.subr.mxu0 0.0
    %1435 = vmatpush1.msra.mxu0 %v409
    %1436 = vmatprep.subr.mxu0 0.0
    %1437 = vmatpush1.msra.mxu0 %v410
    %1438 = vmatprep.subr.mxu0 0.0
    %1439 = vmatpush1.msra.mxu0 %v411
    %1440 = vmatprep.subr.mxu0 0.0
    %1441 = vmatpush1.msra.mxu0 %v412
    %1442 = vmatprep.subr.mxu0 0.0
    %1443 = vmatpush1.msra.mxu0 %v413
    %1444 = vmatprep.subr.mxu0 0.0
    %1445 = vmatpush1.msra.mxu0 %v414
    %1446 = vmatprep.subr.mxu0 0.0
    %1447 = vmatpush1.msra.mxu0 %v415
    %1448 = vmatprep.subr.mxu0 0.0
    %1449 = vmatpush1.msra.mxu0 %v416
    %1450 = vmatprep.subr.mxu0 0.0
    %1451 = vmatpush1.msra.mxu0 %v417
    %1452 = vmatprep.subr.mxu0 0.0
    %1453 = vmatpush1.msra.mxu0 %v418
    %1454 = vmatprep.subr.mxu0 0.0
    %1455 = vmatpush1.msra.mxu0 %v419
    %1456 = vmatprep.subr.mxu0 0.0
    %1457 = vmatpush1.msra.mxu0 %v420
    %1458 = vmatprep.subr.mxu0 0.0
    %1459 = vmatpush1.msra.mxu0 %v421
    %1460 = vmatprep.subr.mxu0 0.0
    %1461 = vmatpush1.msra.mxu0 %v422
    %1462 = vmatprep.subr.mxu0 0.0
    %1463 = vmatpush1.msra.mxu0 %v423
    %1464 = vmatprep.subr.mxu0 0.0
    %1465 = vmatpush1.msra.mxu0 %v424
    %1466 = vmatprep.subr.mxu0 0.0
    %1467 = vmatpush1.msra.mxu0 %v425
    %1468 = vmatprep.subr.mxu0 0.0
    %1469 = vmatpush1.msra.mxu0 %v426
    %1470 = vmatprep.subr.mxu0 0.0
    %1471 = vmatpush1.msra.mxu0 %v427
    %1472 = vmatprep.subr.mxu0 0.0
    %1473 = vmatpush1.msra.mxu0 %v428
    %1474 = vmatprep.subr.mxu0 0.0
    %1475 = vmatpush1.msra.mxu0 %v429
    %1476 = vmatprep.subr.mxu0 0.0
    %1477 = vmatpush1.msra.mxu0 %v430
    %1478 = vmatprep.subr.mxu0 0.0
    %1479 = vmatpush1.msra.mxu0 %v431
    %1480 = vmatprep.subr.mxu0 0.0
    %1481 = vmatpush1.msra.mxu0 %v432
    %1482 = vmatprep.subr.mxu0 0.0
    %1483 = vmatpush1.msra.mxu0 %v433
    %1484 = vmatprep.subr.mxu0 0.0
    %1485 = vmatpush1.msra.mxu0 %v434
    %1486 = vmatprep.subr.mxu0 0.0
    %1487 = vmatpush1.msra.mxu0 %v435
    %1488 = vmatprep.subr.mxu0 0.0
    %1489 = vmatpush1.msra.mxu0 %v436
    %1490 = vmatprep.subr.mxu0 0.0
    %1491 = vmatpush1.msra.mxu0 %v437
    %1492 = vmatprep.mubr.f32.mxu0 %v561
    %1493 = vmatmul.mubr.f32.gmra.mrb[0].mxu0 %v560
    %v1494 = vpop.f32.mrb[0].mxu0
    %v1495 = vadd.f32 %v1425, %v1494
    %v1496 = vpop.f32.mrb[0].mxu0
    %1497 = vdwg.mxu0
    %vm1498 = vcmask 254976
    %1499 = vst.msk [vmem:[#allocation2] sm:$0x3] %vm1498, %v1495
    // Predicated region
    $region14: #{temporal_pooling_spk.1} parent=1 // pred_check
      _
    $region15: #{temporal_pooling_spk.1} parent=1 // pred_check_branch
      %1501 = sbr.rel (0) target = $region17
    $region16: #{temporal_pooling_spk.1} parent=1 // pred_region
      %s1503 = ssub.s32 32, 32
      %1504 = vsyncadd [#allocation3], %s1503
      %s1506 = sshll.u32 [#allocation2], 4
      %s1507 = int_to_ptr.vmem [resolvable:$true] %s1506
      %1509 = dma.vmem_to_hbm [thread:$0]  %s1507, 32, %s3, [#allocation3]
    $region17: #{temporal_pooling_spk.1} parent=1 // pred_fallthru
      _
    // Predicated region
    $region18: #{temporal_pooling_spk.1} parent=1 // pred_check
      _
    $region19: #{temporal_pooling_spk.1} parent=1 // pred_check_branch
      %1511 = sbr.rel (0) target = $region21
    $region20: #{temporal_pooling_spk.1} parent=1 // pred_region
      %1512 = dma.done [#allocation3], 32
    $region21: #{temporal_pooling_spk.1} parent=1 // pred_fallthru
      _
    %1513 = vsyncpa [#allocation3], 1

</llo_original>
